<compile_context>
chip_gen: v6e
topology: v6e:2x2x1
jax: 0.10.0
libtpu: 0.0.40
codegen_flags: <defaults>
</compile_context>

<pallas_src>
import functools

import jax
import jax.numpy as jnp
from jax.experimental import pallas as pl
from jax.experimental.pallas import tpu as pltpu


# ------------------------------------------------------------------ specs

def _resident_spec(shape):
    """Full-array block pinned to block index 0 for every grid step (weights/biases)."""
    nd = len(shape)
    return pl.BlockSpec(shape, lambda g, _nd=nd: (0,) * _nd)


# ------------------------------------------------------------------ fused kernel

def make_brain_gcn_kernel(num_layers, num_nodes):
    inv_nodes = 1.0 / float(num_nodes)

    def kernel(*refs):
        x_ref, adj_ref = refs[0], refs[1]
        layer_refs = refs[2:2 + 6 * num_layers]
        w1_ref, b1_ref, w2_ref, b2_ref = refs[2 + 6 * num_layers:6 + 6 * num_layers]
        out_ref = refs[6 + 6 * num_layers]

        adj = adj_ref[0]                                                  # (n, n) bf16
        deg = jnp.sum(adj.astype(jnp.float32), axis=-1, keepdims=True)    # in-degree (n, 1)

        z = x_ref[...]                                                    # (n, fin) bf16
        for l in range(num_layers):
            wa, wb, ba, bp, bns, bnt = layer_refs[6 * l:6 * l + 6]
            # folded MPGCNConv('node_concate', aggr='add') + Linear(hidden, proj)
            za = jnp.dot(z, wa[...], preferred_element_type=jnp.float32)  # x @ W_A
            zb = jnp.dot(z, wb[...], preferred_element_type=jnp.float32)  # x @ W_B
            y = (deg * (za + ba[...])
                 + jnp.dot(adj, zb.astype(jnp.bfloat16),
                           preferred_element_type=jnp.float32)
                 + bp[...])
            y = jnp.where(y >= 0.0, y, 0.2 * y)        # LeakyReLU(0.2)
            y = y * bns[...] + bnt[...]                # BatchNorm1d (eval); Dropout(eval)=id
            z = y.astype(jnp.bfloat16)

        # global_mean_pool over this graph's nodes, then BasicMLP head.
        pooled = jnp.sum(z.astype(jnp.float32), axis=0, keepdims=True) * inv_nodes
        h = jnp.dot(pooled.astype(jnp.bfloat16), w1_ref[...],
                    preferred_element_type=jnp.float32) + b1_ref[...]
        h = jnp.where(h >= 0.0, h, 0.2 * h)
        logits = jnp.dot(h.astype(jnp.bfloat16), w2_ref[...],
                         preferred_element_type=jnp.float32) + b2_ref[...]
        out_ref[...] = logits.reshape(1, 1, -1)

    return kernel


# ------------------------------------------------------------------ forward wrapper

@functools.partial(jax.jit, static_argnums=(5,))
def brain_gcn_forward(x, edge_index, edge_attr, batch, params, num_graphs):
    """Full BrainGCN forward (pooling='mean'), fused into one Pallas kernel."""
    n_total, f_in = x.shape
    num_nodes = n_total // num_graphs
    num_layers = len(params["blocks"])
    n_classes = params["mlp"]["w2"].shape[1]

    src, dst = edge_index[0], edge_index[1]
    _ = jnp.abs(edge_attr)  # use_abs_weight=True, but unused by 'node_concate' (dead code)

    # Per-graph block-diagonal adjacency (dst x src edge counts). PyG batching stores each
    # graph's num_nodes nodes contiguously and all edges are intra-graph.
    g_dst = batch[dst]
    g_src = batch[src]
    adj_blocks = jnp.zeros((num_graphs, num_nodes, num_nodes), jnp.float32)
    adj_blocks = adj_blocks.at[g_dst,
                               dst - g_dst * num_nodes,
                               src - g_src * num_nodes].add(1.0)
    adj_blocks = adj_blocks.astype(jnp.bfloat16)

    inputs = [x.astype(jnp.bfloat16), adj_blocks]
    in_specs = [
        pl.BlockSpec((num_nodes, f_in), lambda g: (g, 0)),
        pl.BlockSpec((1, num_nodes, num_nodes), lambda g: (g, 0, 0)),
    ]

    # Fold static per-block weights once (f32), cast matmul operands to bf16.
    for blk in params["blocks"]:
        w_a = blk["w_lin"] @ blk["w_ei"] @ blk["w_proj"]
        w_b = blk["w_lin"] @ blk["w_ej"] @ blk["w_proj"]
        b_a = blk["b_edge"] @ blk["w_proj"]
        layer_args = [w_a.astype(jnp.bfloat16), w_b.astype(jnp.bfloat16),
                      b_a, blk["b_proj"], blk["bn_scale"], blk["bn_shift"]]
        inputs += layer_args
        in_specs += [_resident_spec(a.shape) for a in layer_args]

    mlp = params["mlp"]
    mlp_args = [mlp["w1"].astype(jnp.bfloat16), mlp["b1"],
                mlp["w2"].astype(jnp.bfloat16), mlp["b2"]]
    inputs += mlp_args
    in_specs += [_resident_spec(a.shape) for a in mlp_args]

    out = pl.pallas_call(
        make_brain_gcn_kernel(num_layers, num_nodes),
        grid=(num_graphs,),
        in_specs=in_specs,
        out_specs=pl.BlockSpec((1, 1, n_classes), lambda g: (g, 0, 0)),
        out_shape=jax.ShapeDtypeStruct((num_graphs, 1, n_classes), jnp.float32),
        compiler_params=pltpu.CompilerParams(
            dimension_semantics=("parallel",)),
    )(*inputs)
    return out[:, 0, :]


# ------------------------------------------------------------------ params

def init_block_params(key, fin, hidden, proj):
    k = jax.random.split(key, 6)
    eps = 1e-5
    return {
        "w_lin":  jax.random.normal(k[0], (fin, hidden), jnp.float32) / jnp.sqrt(fin),
        # edge_lin: Linear(2*hidden, hidden); split into x_i / x_j halves.
        "w_ei":   jax.random.normal(k[1], (hidden, hidden), jnp.float32) / jnp.sqrt(2 * hidden),
        "w_ej":   jax.random.normal(k[2], (hidden, hidden), jnp.float32) / jnp.sqrt(2 * hidden),
        "b_edge": jax.random.normal(k[3], (1, hidden), jnp.float32) * 0.01,
        "w_proj": jax.random.normal(k[4], (hidden, proj), jnp.float32) / jnp.sqrt(hidden),
        "b_proj": jax.random.normal(k[5], (1, proj), jnp.float32) * 0.01,
        # BatchNorm1d eval mode with default running stats (mean=0, var=1, affine identity).
        # TODO(synk): for a trained checkpoint fold real running stats / gamma / beta here.
        "bn_scale": jnp.full((1, proj), 1.0 / jnp.sqrt(1.0 + eps), jnp.float32),
        "bn_shift": jnp.zeros((1, proj), jnp.float32),
    }


def init_params(key, input_dim, hidden_dim, final_node_dim, mlp_hidden, n_classes,
                num_layers):
    keys = jax.random.split(key, num_layers + 1)
    blocks = []
    fin = input_dim
    for layer in range(num_layers - 1):
        blocks.append(init_block_params(keys[layer], fin, hidden_dim, hidden_dim))
        fin = hidden_dim
    # last block: proj_dim = final_node_dim (pooling='mean')
    blocks.append(init_block_params(keys[num_layers - 1], fin, hidden_dim, final_node_dim))

    km = jax.random.split(keys[num_layers], 4)
    # TODO(synk): BasicMLP's exact config is not given; using a 2-layer MLP
    # (Linear -> LeakyReLU(0.2) -> Linear) as the prediction head.
    mlp = {
        "w1": jax.random.normal(km[0], (final_node_dim, mlp_hidden), jnp.float32)
              / jnp.sqrt(final_node_dim),
        "b1": jax.random.normal(km[1], (1, mlp_hidden), jnp.float32) * 0.01,
        "w2": jax.random.normal(km[2], (mlp_hidden, n_classes), jnp.float32)
              / jnp.sqrt(mlp_hidden),
        "b2": jax.random.normal(km[3], (1, n_classes), jnp.float32) * 0.01,
    }
    return {"blocks": blocks, "mlp": mlp}


# ------------------------------------------------------------------ main

if __name__ == "__main__":
    # Small BrainGB-style configuration.
    num_graphs = 2
    num_nodes = 16            # nodes (ROIs) per graph
    input_dim = 16            # node feature dim (connectivity profile)
    hidden_dim = 32
    final_node_dim = 8
    mlp_hidden = 16
    n_classes = 2
    num_layers = 2
    n_total = num_graphs * num_nodes

    key = jax.random.PRNGKey(0)
    kx, ke, kp = jax.random.split(key, 3)

    # Node features.
    x = jax.random.normal(kx, (n_total, input_dim), jnp.float32)

    # Fully-connected directed edges (no self loops) within each graph.
    ii, jj = jnp.meshgrid(jnp.arange(num_nodes), jnp.arange(num_nodes), indexing="ij")
    mask = (ii != jj).reshape(-1)
    src_local = jj.reshape(-1)[mask]
    dst_local = ii.reshape(-1)[mask]
    src = jnp.concatenate([src_local + g * num_nodes for g in range(num_graphs)])
    dst = jnp.concatenate([dst_local + g * num_nodes for g in range(num_graphs)])
    edge_index = jnp.stack([src, dst], axis=0).astype(jnp.int32)
    edge_attr = jax.random.normal(ke, (edge_index.shape[1],), jnp.float32)
    batch = (jnp.arange(n_total) // num_nodes).astype(jnp.int32)

    params = init_params(kp, input_dim, hidden_dim, final_node_dim,
                         mlp_hidden, n_classes, num_layers)

    out = brain_gcn_forward(x, edge_index, edge_attr, batch, params, num_graphs)
    out = jax.block_until_ready(out)
    assert out.shape == (num_graphs, n_classes)
    print("KERNEL_OK")
</pallas_src>

<mosaic_0001>
module attributes {stable_mosaic.version = 11 : i64} {
  func.func private @main(%arg0: i32) attributes {dimension_semantics = [#tpu.dimension_semantics<core_parallel>], iteration_bounds = array<i64: 2>, tpu.core_type = #tpu.core_type<sc_scalar_subcore>, window_params = []} {
    return
  }
}

module attributes {stable_mosaic.version = 11 : i64} {
  func.func private @main(%arg0: i32) attributes {dimension_semantics = [#tpu.dimension_semantics<core_parallel>], iteration_bounds = array<i64: 2>, tpu.core_type = #tpu.core_type<sc_scalar_subcore>, window_params = []} {
    return
  }
}

module attributes {stable_mosaic.version = 11 : i64} {
  func.func @kernel(%arg0: i32, %arg1: memref<16x16xbf16, #tpu.memory_space<vmem>>, %arg2: memref<1x16x16xbf16, #tpu.memory_space<vmem>>, %arg3: memref<16x32xbf16, #tpu.memory_space<vmem>>, %arg4: memref<16x32xbf16, #tpu.memory_space<vmem>>, %arg5: memref<1x32xf32, #tpu.memory_space<vmem>>, %arg6: memref<1x32xf32, #tpu.memory_space<vmem>>, %arg7: memref<1x32xf32, #tpu.memory_space<vmem>>, %arg8: memref<1x32xf32, #tpu.memory_space<vmem>>, %arg9: memref<32x8xbf16, #tpu.memory_space<vmem>>, %arg10: memref<32x8xbf16, #tpu.memory_space<vmem>>, %arg11: memref<1x8xf32, #tpu.memory_space<vmem>>, %arg12: memref<1x8xf32, #tpu.memory_space<vmem>>, %arg13: memref<1x8xf32, #tpu.memory_space<vmem>>, %arg14: memref<1x8xf32, #tpu.memory_space<vmem>>, %arg15: memref<8x16xbf16, #tpu.memory_space<vmem>>, %arg16: memref<1x16xf32, #tpu.memory_space<vmem>>, %arg17: memref<16x2xbf16, #tpu.memory_space<vmem>>, %arg18: memref<1x2xf32, #tpu.memory_space<vmem>>, %arg19: memref<1x1x2xf32, #tpu.memory_space<vmem>>) attributes {dimension_semantics = [#tpu.dimension_semantics<parallel>], iteration_bounds = array<i64: 2>, scalar_prefetch = 0 : i64, scratch_operands = 0 : i64, tpu.core_type = #tpu.core_type<tc>, window_params = [{transform_indices = @transform_0, window_bounds = array<i64: 16, 16>}, {transform_indices = @transform_1, window_bounds = array<i64: 1, 16, 16>}, {pipeline_mode = #tpu.pipeline_mode<synchronous>, transform_indices = @transform_2, window_bounds = array<i64: 16, 32>}, {pipeline_mode = #tpu.pipeline_mode<synchronous>, transform_indices = @transform_3, window_bounds = array<i64: 16, 32>}, {pipeline_mode = #tpu.pipeline_mode<synchronous>, transform_indices = @transform_4, window_bounds = array<i64: 1, 32>}, {pipeline_mode = #tpu.pipeline_mode<synchronous>, transform_indices = @transform_5, window_bounds = array<i64: 1, 32>}, {pipeline_mode = #tpu.pipeline_mode<synchronous>, transform_indices = @transform_6, window_bounds = array<i64: 1, 32>}, {pipeline_mode = #tpu.pipeline_mode<synchronous>, transform_indices = @transform_7, window_bounds = array<i64: 1, 32>}, {pipeline_mode = #tpu.pipeline_mode<synchronous>, transform_indices = @transform_8, window_bounds = array<i64: 32, 8>}, {pipeline_mode = #tpu.pipeline_mode<synchronous>, transform_indices = @transform_9, window_bounds = array<i64: 32, 8>}, {pipeline_mode = #tpu.pipeline_mode<synchronous>, transform_indices = @transform_10, window_bounds = array<i64: 1, 8>}, {pipeline_mode = #tpu.pipeline_mode<synchronous>, transform_indices = @transform_11, window_bounds = array<i64: 1, 8>}, {pipeline_mode = #tpu.pipeline_mode<synchronous>, transform_indices = @transform_12, window_bounds = array<i64: 1, 8>}, {pipeline_mode = #tpu.pipeline_mode<synchronous>, transform_indices = @transform_13, window_bounds = array<i64: 1, 8>}, {pipeline_mode = #tpu.pipeline_mode<synchronous>, transform_indices = @transform_14, window_bounds = array<i64: 8, 16>}, {pipeline_mode = #tpu.pipeline_mode<synchronous>, transform_indices = @transform_15, window_bounds = array<i64: 1, 16>}, {pipeline_mode = #tpu.pipeline_mode<synchronous>, transform_indices = @transform_16, window_bounds = array<i64: 16, 2>}, {pipeline_mode = #tpu.pipeline_mode<synchronous>, transform_indices = @transform_17, window_bounds = array<i64: 1, 2>}, {transform_indices = @transform_18, window_bounds = array<i64: 1, 1, 2>}]} {
    %c0 = arith.constant 0 : index
    %c0_0 = arith.constant 0 : index
    %c0_1 = arith.constant 0 : index
    %0 = vector.load %arg2[%c0, %c0_0, %c0_1] : memref<1x16x16xbf16, #tpu.memory_space<vmem>>, vector<1x16x16xbf16>
    %1 = vector.shape_cast %0 : vector<1x16x16xbf16> to vector<16x16xbf16>
    %2 = arith.extf %1 : vector<16x16xbf16> to vector<16x16xf32>
    %cst = arith.constant dense<0.000000e+00> : vector<16xf32>
    %3 = vector.multi_reduction <add>, %2, %cst [1] : vector<16x16xf32> to vector<16xf32>
    %4 = vector.shape_cast %3 : vector<16xf32> to vector<16x1xf32>
    %c0_2 = arith.constant 0 : index
    %c0_3 = arith.constant 0 : index
    %5 = vector.load %arg1[%c0_2, %c0_3] : memref<16x16xbf16, #tpu.memory_space<vmem>>, vector<16x16xbf16>
    %c0_4 = arith.constant 0 : index
    %c0_5 = arith.constant 0 : index
    %6 = vector.load %arg3[%c0_4, %c0_5] : memref<16x32xbf16, #tpu.memory_space<vmem>>, vector<16x32xbf16>
    %cst_6 = arith.constant dense<0.000000e+00> : vector<16x32xf32>
    %7 = tpu.matmul %5, %6, %cst_6 {dimension_numbers = #tpu.dot_dimension_numbers<[1], [0], [0], [1], [0, 0, 1, 1], [], []>} : vector<16x16xbf16>, vector<16x32xbf16>, vector<16x32xf32> -> vector<16x32xf32>
    %c0_7 = arith.constant 0 : index
    %c0_8 = arith.constant 0 : index
    %8 = vector.load %arg4[%c0_7, %c0_8] : memref<16x32xbf16, #tpu.memory_space<vmem>>, vector<16x32xbf16>
    %cst_9 = arith.constant dense<0.000000e+00> : vector<16x32xf32>
    %9 = tpu.matmul %5, %8, %cst_9 {dimension_numbers = #tpu.dot_dimension_numbers<[1], [0], [0], [1], [0, 0, 1, 1], [], []>} : vector<16x16xbf16>, vector<16x32xbf16>, vector<16x32xf32> -> vector<16x32xf32>
    %c0_10 = arith.constant 0 : index
    %c0_11 = arith.constant 0 : index
    %10 = vector.load %arg5[%c0_10, %c0_11] : memref<1x32xf32, #tpu.memory_space<vmem>>, vector<1x32xf32>
    %11 = vector.broadcast %10 : vector<1x32xf32> to vector<16x32xf32>
    %12 = arith.addf %7, %11 : vector<16x32xf32>
    %13 = vector.broadcast %4 : vector<16x1xf32> to vector<16x32xf32>
    %14 = arith.mulf %13, %12 : vector<16x32xf32>
    %15 = arith.truncf %9 : vector<16x32xf32> to vector<16x32xbf16>
    %cst_12 = arith.constant dense<0.000000e+00> : vector<16x32xf32>
    %16 = tpu.matmul %1, %15, %cst_12 {dimension_numbers = #tpu.dot_dimension_numbers<[1], [0], [0], [1], [0, 0, 1, 1], [], []>} : vector<16x16xbf16>, vector<16x32xbf16>, vector<16x32xf32> -> vector<16x32xf32>
    %17 = arith.addf %14, %16 : vector<16x32xf32>
    %c0_13 = arith.constant 0 : index
    %c0_14 = arith.constant 0 : index
    %18 = vector.load %arg6[%c0_13, %c0_14] : memref<1x32xf32, #tpu.memory_space<vmem>>, vector<1x32xf32>
    %19 = vector.broadcast %18 : vector<1x32xf32> to vector<16x32xf32>
    %20 = arith.addf %17, %19 : vector<16x32xf32>
    %cst_15 = arith.constant 0.000000e+00 : f32
    %21 = vector.broadcast %cst_15 : f32 to vector<16x32xf32>
    %22 = arith.cmpf oge, %20, %21 : vector<16x32xf32>
    %cst_16 = arith.constant 2.000000e-01 : f32
    %23 = vector.broadcast %cst_16 : f32 to vector<16x32xf32>
    %24 = arith.mulf %23, %20 : vector<16x32xf32>
    %25 = arith.select %22, %20, %24 : vector<16x32xi1>, vector<16x32xf32>
    %c0_17 = arith.constant 0 : index
    %c0_18 = arith.constant 0 : index
    %26 = vector.load %arg7[%c0_17, %c0_18] : memref<1x32xf32, #tpu.memory_space<vmem>>, vector<1x32xf32>
    %27 = vector.broadcast %26 : vector<1x32xf32> to vector<16x32xf32>
    %28 = arith.mulf %25, %27 : vector<16x32xf32>
    %c0_19 = arith.constant 0 : index
    %c0_20 = arith.constant 0 : index
    %29 = vector.load %arg8[%c0_19, %c0_20] : memref<1x32xf32, #tpu.memory_space<vmem>>, vector<1x32xf32>
    %30 = vector.broadcast %29 : vector<1x32xf32> to vector<16x32xf32>
    %31 = arith.addf %28, %30 : vector<16x32xf32>
    %32 = arith.truncf %31 : vector<16x32xf32> to vector<16x32xbf16>
    %c0_21 = arith.constant 0 : index
    %c0_22 = arith.constant 0 : index
    %33 = vector.load %arg9[%c0_21, %c0_22] : memref<32x8xbf16, #tpu.memory_space<vmem>>, vector<32x8xbf16>
    %cst_23 = arith.constant dense<0.000000e+00> : vector<16x8xf32>
    %34 = tpu.matmul %32, %33, %cst_23 {dimension_numbers = #tpu.dot_dimension_numbers<[1], [0], [0], [1], [0, 0, 1, 1], [], []>} : vector<16x32xbf16>, vector<32x8xbf16>, vector<16x8xf32> -> vector<16x8xf32>
    %c0_24 = arith.constant 0 : index
    %c0_25 = arith.constant 0 : index
    %35 = vector.load %arg10[%c0_24, %c0_25] : memref<32x8xbf16, #tpu.memory_space<vmem>>, vector<32x8xbf16>
    %cst_26 = arith.constant dense<0.000000e+00> : vector<16x8xf32>
    %36 = tpu.matmul %32, %35, %cst_26 {dimension_numbers = #tpu.dot_dimension_numbers<[1], [0], [0], [1], [0, 0, 1, 1], [], []>} : vector<16x32xbf16>, vector<32x8xbf16>, vector<16x8xf32> -> vector<16x8xf32>
    %c0_27 = arith.constant 0 : index
    %c0_28 = arith.constant 0 : index
    %37 = vector.load %arg11[%c0_27, %c0_28] : memref<1x8xf32, #tpu.memory_space<vmem>>, vector<1x8xf32>
    %38 = vector.broadcast %37 : vector<1x8xf32> to vector<16x8xf32>
    %39 = arith.addf %34, %38 : vector<16x8xf32>
    %40 = vector.broadcast %4 : vector<16x1xf32> to vector<16x8xf32>
    %41 = arith.mulf %40, %39 : vector<16x8xf32>
    %42 = arith.truncf %36 : vector<16x8xf32> to vector<16x8xbf16>
    %cst_29 = arith.constant dense<0.000000e+00> : vector<16x8xf32>
    %43 = tpu.matmul %1, %42, %cst_29 {dimension_numbers = #tpu.dot_dimension_numbers<[1], [0], [0], [1], [0, 0, 1, 1], [], []>} : vector<16x16xbf16>, vector<16x8xbf16>, vector<16x8xf32> -> vector<16x8xf32>
    %44 = arith.addf %41, %43 : vector<16x8xf32>
    %c0_30 = arith.constant 0 : index
    %c0_31 = arith.constant 0 : index
    %45 = vector.load %arg12[%c0_30, %c0_31] : memref<1x8xf32, #tpu.memory_space<vmem>>, vector<1x8xf32>
    %46 = vector.broadcast %45 : vector<1x8xf32> to vector<16x8xf32>
    %47 = arith.addf %44, %46 : vector<16x8xf32>
    %cst_32 = arith.constant 0.000000e+00 : f32
    %48 = vector.broadcast %cst_32 : f32 to vector<16x8xf32>
    %49 = arith.cmpf oge, %47, %48 : vector<16x8xf32>
    %cst_33 = arith.constant 2.000000e-01 : f32
    %50 = vector.broadcast %cst_33 : f32 to vector<16x8xf32>
    %51 = arith.mulf %50, %47 : vector<16x8xf32>
    %52 = arith.select %49, %47, %51 : vector<16x8xi1>, vector<16x8xf32>
    %c0_34 = arith.constant 0 : index
    %c0_35 = arith.constant 0 : index
    %53 = vector.load %arg13[%c0_34, %c0_35] : memref<1x8xf32, #tpu.memory_space<vmem>>, vector<1x8xf32>
    %54 = vector.broadcast %53 : vector<1x8xf32> to vector<16x8xf32>
    %55 = arith.mulf %52, %54 : vector<16x8xf32>
    %c0_36 = arith.constant 0 : index
    %c0_37 = arith.constant 0 : index
    %56 = vector.load %arg14[%c0_36, %c0_37] : memref<1x8xf32, #tpu.memory_space<vmem>>, vector<1x8xf32>
    %57 = vector.broadcast %56 : vector<1x8xf32> to vector<16x8xf32>
    %58 = arith.addf %55, %57 : vector<16x8xf32>
    %59 = arith.truncf %58 : vector<16x8xf32> to vector<16x8xbf16>
    %60 = arith.extf %59 : vector<16x8xbf16> to vector<16x8xf32>
    %cst_38 = arith.constant dense<0.000000e+00> : vector<8xf32>
    %61 = vector.multi_reduction <add>, %60, %cst_38 [0] : vector<16x8xf32> to vector<8xf32>
    %62 = vector.shape_cast %61 : vector<8xf32> to vector<1x8xf32>
    %cst_39 = arith.constant 6.250000e-02 : f32
    %63 = vector.broadcast %cst_39 : f32 to vector<1x8xf32>
    %64 = arith.mulf %62, %63 : vector<1x8xf32>
    %65 = arith.truncf %64 : vector<1x8xf32> to vector<1x8xbf16>
    %c0_40 = arith.constant 0 : index
    %c0_41 = arith.constant 0 : index
    %66 = vector.load %arg15[%c0_40, %c0_41] : memref<8x16xbf16, #tpu.memory_space<vmem>>, vector<8x16xbf16>
    %cst_42 = arith.constant dense<0.000000e+00> : vector<1x16xf32>
    %67 = tpu.matmul %65, %66, %cst_42 {dimension_numbers = #tpu.dot_dimension_numbers<[1], [0], [0], [1], [0, 0, 1, 1], [], []>} : vector<1x8xbf16>, vector<8x16xbf16>, vector<1x16xf32> -> vector<1x16xf32>
    %c0_43 = arith.constant 0 : index
    %c0_44 = arith.constant 0 : index
    %68 = vector.load %arg16[%c0_43, %c0_44] : memref<1x16xf32, #tpu.memory_space<vmem>>, vector<1x16xf32>
    %69 = arith.addf %67, %68 : vector<1x16xf32>
    %cst_45 = arith.constant 0.000000e+00 : f32
    %70 = vector.broadcast %cst_45 : f32 to vector<1x16xf32>
    %71 = arith.cmpf oge, %69, %70 : vector<1x16xf32>
    %cst_46 = arith.constant 2.000000e-01 : f32
    %72 = vector.broadcast %cst_46 : f32 to vector<1x16xf32>
    %73 = arith.mulf %72, %69 : vector<1x16xf32>
    %74 = arith.select %71, %69, %73 : vector<1x16xi1>, vector<1x16xf32>
    %75 = arith.truncf %74 : vector<1x16xf32> to vector<1x16xbf16>
    %c0_47 = arith.constant 0 : index
    %c0_48 = arith.constant 0 : index
    %76 = vector.load %arg17[%c0_47, %c0_48] : memref<16x2xbf16, #tpu.memory_space<vmem>>, vector<16x2xbf16>
    %cst_49 = arith.constant dense<0.000000e+00> : vector<1x2xf32>
    %77 = tpu.matmul %75, %76, %cst_49 {dimension_numbers = #tpu.dot_dimension_numbers<[1], [0], [0], [1], [0, 0, 1, 1], [], []>} : vector<1x16xbf16>, vector<16x2xbf16>, vector<1x2xf32> -> vector<1x2xf32>
    %c0_50 = arith.constant 0 : index
    %c0_51 = arith.constant 0 : index
    %78 = vector.load %arg18[%c0_50, %c0_51] : memref<1x2xf32, #tpu.memory_space<vmem>>, vector<1x2xf32>
    %79 = arith.addf %77, %78 : vector<1x2xf32>
    %80 = vector.shape_cast %79 : vector<1x2xf32> to vector<1x1x2xf32>
    %c0_52 = arith.constant 0 : index
    %c0_53 = arith.constant 0 : index
    %c0_54 = arith.constant 0 : index
    %81 = vector.load %arg19[%c0_52, %c0_53, %c0_54] : memref<1x1x2xf32, #tpu.memory_space<vmem>>, vector<1x1x2xf32>
    tpu.vector_store %arg19[%c0_52, %c0_53, %c0_54], %80 {strides = array<i32>} : memref<1x1x2xf32, #tpu.memory_space<vmem>>, vector<1x1x2xf32>,
    return
  }
  func.func @transform_0(%arg0: i32) -> (i32, i32) {
    %c0_i32 = arith.constant 0 : i32
    %c0_i32_0 = arith.constant 0 : i32
    return %arg0, %c0_i32 : i32, i32
  }
  func.func @transform_1(%arg0: i32) -> (i32, i32, i32) {
    %c0_i32 = arith.constant 0 : i32
    %c0_i32_0 = arith.constant 0 : i32
    %c0_i32_1 = arith.constant 0 : i32
    return %arg0, %c0_i32, %c0_i32_0 : i32, i32, i32
  }
  func.func @transform_2(%arg0: i32) -> (i32, i32) {
    %c0_i32 = arith.constant 0 : i32
    %c0_i32_0 = arith.constant 0 : i32
    %c0_i32_1 = arith.constant 0 : i32
    return %c0_i32, %c0_i32_0 : i32, i32
  }
  func.func @transform_3(%arg0: i32) -> (i32, i32) {
    %c0_i32 = arith.constant 0 : i32
    %c0_i32_0 = arith.constant 0 : i32
    %c0_i32_1 = arith.constant 0 : i32
    return %c0_i32, %c0_i32_0 : i32, i32
  }
  func.func @transform_4(%arg0: i32) -> (i32, i32) {
    %c0_i32 = arith.constant 0 : i32
    %c0_i32_0 = arith.constant 0 : i32
    %c0_i32_1 = arith.constant 0 : i32
    return %c0_i32, %c0_i32_0 : i32, i32
  }
  func.func @transform_5(%arg0: i32) -> (i32, i32) {
    %c0_i32 = arith.constant 0 : i32
    %c0_i32_0 = arith.constant 0 : i32
    %c0_i32_1 = arith.constant 0 : i32
    return %c0_i32, %c0_i32_0 : i32, i32
  }
  func.func @transform_6(%arg0: i32) -> (i32, i32) {
    %c0_i32 = arith.constant 0 : i32
    %c0_i32_0 = arith.constant 0 : i32
    %c0_i32_1 = arith.constant 0 : i32
    return %c0_i32, %c0_i32_0 : i32, i32
  }
  func.func @transform_7(%arg0: i32) -> (i32, i32) {
    %c0_i32 = arith.constant 0 : i32
    %c0_i32_0 = arith.constant 0 : i32
    %c0_i32_1 = arith.constant 0 : i32
    return %c0_i32, %c0_i32_0 : i32, i32
  }
  func.func @transform_8(%arg0: i32) -> (i32, i32) {
    %c0_i32 = arith.constant 0 : i32
    %c0_i32_0 = arith.constant 0 : i32
    %c0_i32_1 = arith.constant 0 : i32
    return %c0_i32, %c0_i32_0 : i32, i32
  }
  func.func @transform_9(%arg0: i32) -> (i32, i32) {
    %c0_i32 = arith.constant 0 : i32
    %c0_i32_0 = arith.constant 0 : i32
    %c0_i32_1 = arith.constant 0 : i32
    return %c0_i32, %c0_i32_0 : i32, i32
  }
  func.func @transform_10(%arg0: i32) -> (i32, i32) {
    %c0_i32 = arith.constant 0 : i32
    %c0_i32_0 = arith.constant 0 : i32
    %c0_i32_1 = arith.constant 0 : i32
    return %c0_i32, %c0_i32_0 : i32, i32
  }
  func.func @transform_11(%arg0: i32) -> (i32, i32) {
    %c0_i32 = arith.constant 0 : i32
    %c0_i32_0 = arith.constant 0 : i32
    %c0_i32_1 = arith.constant 0 : i32
    return %c0_i32, %c0_i32_0 : i32, i32
  }
  func.func @transform_12(%arg0: i32) -> (i32, i32) {
    %c0_i32 = arith.constant 0 : i32
    %c0_i32_0 = arith.constant 0 : i32
    %c0_i32_1 = arith.constant 0 : i32
    return %c0_i32, %c0_i32_0 : i32, i32
  }
  func.func @transform_13(%arg0: i32) -> (i32, i32) {
    %c0_i32 = arith.constant 0 : i32
    %c0_i32_0 = arith.constant 0 : i32
    %c0_i32_1 = arith.constant 0 : i32
    return %c0_i32, %c0_i32_0 : i32, i32
  }
  func.func @transform_14(%arg0: i32) -> (i32, i32) {
    %c0_i32 = arith.constant 0 : i32
    %c0_i32_0 = arith.constant 0 : i32
    %c0_i32_1 = arith.constant 0 : i32
    return %c0_i32, %c0_i32_0 : i32, i32
  }
  func.func @transform_15(%arg0: i32) -> (i32, i32) {
    %c0_i32 = arith.constant 0 : i32
    %c0_i32_0 = arith.constant 0 : i32
    %c0_i32_1 = arith.constant 0 : i32
    return %c0_i32, %c0_i32_0 : i32, i32
  }
  func.func @transform_16(%arg0: i32) -> (i32, i32) {
    %c0_i32 = arith.constant 0 : i32
    %c0_i32_0 = arith.constant 0 : i32
    %c0_i32_1 = arith.constant 0 : i32
    return %c0_i32, %c0_i32_0 : i32, i32
  }
  func.func @transform_17(%arg0: i32) -> (i32, i32) {
    %c0_i32 = arith.constant 0 : i32
    %c0_i32_0 = arith.constant 0 : i32
    %c0_i32_1 = arith.constant 0 : i32
    return %c0_i32, %c0_i32_0 : i32, i32
  }
  func.func @transform_18(%arg0: i32) -> (i32, i32, i32) {
    %c0_i32 = arith.constant 0 : i32
    %c0_i32_0 = arith.constant 0 : i32
    %c0_i32_1 = arith.constant 0 : i32
    return %arg0, %c0_i32, %c0_i32_0 : i32, i32, i32
  }
}

</mosaic_0001>

<llo_original>
// kernel: brain_gcn_forward.1
$region0: #{brain_gcn_forward.1}
  #allocation0 [shape = 'u32[]', space=smem, size = 0x4, offset = 0x4, fixed_abs, tag = 'smem constant byte address 0x4 - core index']
  #allocation1 [shape = 'u32[144,128]{1,0:T(1,128)}', space=vmem, size = 0x12000, scoped, tag = 'internal scratch']
  %s0 = inlined_call_operand.vmem [shape: bf16[32,16], index: 0, kind: input, shape index: {}]
  %s1 = inlined_call_operand.vmem [shape: bf16[2,16,16], index: 1, kind: input, shape index: {}]
  %s2 = inlined_call_operand.vmem [shape: bf16[16,32], index: 2, kind: input, shape index: {}]
  %s3 = inlined_call_operand.vmem [shape: bf16[16,32], index: 3, kind: input, shape index: {}]
  %s4 = inlined_call_operand.vmem [shape: f32[1,32], index: 4, kind: input, shape index: {}]
  %s5 = inlined_call_operand.vmem [shape: f32[1,32], index: 5, kind: input, shape index: {}]
  %s6 = inlined_call_operand.vmem [shape: f32[1,32], index: 6, kind: input, shape index: {}]
  %s7 = inlined_call_operand.vmem [shape: f32[1,32], index: 7, kind: input, shape index: {}]
  %s8 = inlined_call_operand.vmem [shape: bf16[32,8], index: 8, kind: input, shape index: {}]
  %s9 = inlined_call_operand.vmem [shape: bf16[32,8], index: 9, kind: input, shape index: {}]
  %s10 = inlined_call_operand.vmem [shape: f32[1,8], index: 10, kind: input, shape index: {}]
  %s11 = inlined_call_operand.vmem [shape: f32[1,8], index: 11, kind: input, shape index: {}]
  %s12 = inlined_call_operand.vmem [shape: f32[1,8], index: 12, kind: input, shape index: {}]
  %s13 = inlined_call_operand.vmem [shape: f32[1,8], index: 13, kind: input, shape index: {}]
  %s14 = inlined_call_operand.vmem [shape: bf16[8,16], index: 14, kind: input, shape index: {}]
  %s15 = inlined_call_operand.vmem [shape: f32[1,16], index: 15, kind: input, shape index: {}]
  %s16 = inlined_call_operand.vmem [shape: bf16[16,2], index: 16, kind: input, shape index: {}]
  %s17 = inlined_call_operand.vmem [shape: f32[1,2], index: 17, kind: input, shape index: {}]
  %s18 = inlined_call_operand.hbm [shape: f32[2,1,2], index: 18, kind: output, shape index: {}]
  %s19 = sld [smem:[#allocation0]]
  $region105: #{brain_gcn_forward.1} parent=0
    _
  %s21 = ssub.s32 1, %s19
  %s22 = scalar_select 0, %s21, %s19
  $region1: #{brain_gcn_forward.1} parent=0
    #allocation2 [shape = 'u8[1024]{0}', space=vmem, size = 0x400, scoped, tag = 'output window, operand 0']
    #allocation3 [shape = 's32[2]{0}', space=sflag, size = 0x8, scoped, tag = 'scoped memory for brain_gcn_forward.1']
    %23 = vsyncpa [#allocation3], 0
    %s24 = scalar_lea.sflag [#allocation3], 1
    %25 = vsyncpa %s24, 0
    loop: start=0, step=1, limit=4
    $region2: #{brain_gcn_forward.1} parent=1 // loop_pre_header
      _
    $region3: #{brain_gcn_forward.1} parent=1 // loop_header
      %s27 = sphi 0, %s31
      %p28 = scmp.ge.s32.totalorder %s27, 4
      %s37 = sphi 0, %s39
      %s40 = sphi 0, %s37
      %s41 = sphi 0, %s40
      %s57 = sphi 0, %s41
      %s63 = sphi 0, %s65
      %s66 = sphi 0, %s63
      %s67 = sphi 0, %s66
      %s83 = sphi 0, %s67
      %s87 = sphi 0, %s87
      %s89 = sphi 0, %s87
      %s90 = sphi 0, %s89
      %s104 = sphi 0, %s90
      %s108 = sphi 0, %s108
      %s110 = sphi 0, %s108
      %s111 = sphi 0, %s110
      %s125 = sphi 0, %s111
      %s129 = sphi 0, %s129
      %s131 = sphi 0, %s129
      %s132 = sphi 0, %s131
      %s146 = sphi 0, %s132
      %s150 = sphi 0, %s150
      %s152 = sphi 0, %s150
      %s153 = sphi 0, %s152
      %s167 = sphi 0, %s153
      %s171 = sphi 0, %s171
      %s173 = sphi 0, %s171
      %s174 = sphi 0, %s173
      %s188 = sphi 0, %s174
      %s192 = sphi 0, %s192
      %s194 = sphi 0, %s192
      %s195 = sphi 0, %s194
      %s209 = sphi 0, %s195
      %s213 = sphi 0, %s213
      %s215 = sphi 0, %s213
      %s216 = sphi 0, %s215
      %s230 = sphi 0, %s216
      %s234 = sphi 0, %s234
      %s236 = sphi 0, %s234
      %s237 = sphi 0, %s236
      %s251 = sphi 0, %s237
      %s255 = sphi 0, %s255
      %s257 = sphi 0, %s255
      %s258 = sphi 0, %s257
      %s272 = sphi 0, %s258
      %s276 = sphi 0, %s276
      %s278 = sphi 0, %s276
      %s279 = sphi 0, %s278
      %s293 = sphi 0, %s279
      %s297 = sphi 0, %s297
      %s299 = sphi 0, %s297
      %s300 = sphi 0, %s299
      %s314 = sphi 0, %s300
      %s318 = sphi 0, %s318
      %s320 = sphi 0, %s318
      %s321 = sphi 0, %s320
      %s335 = sphi 0, %s321
      %s339 = sphi 0, %s339
      %s341 = sphi 0, %s339
      %s342 = sphi 0, %s341
      %s356 = sphi 0, %s342
      %s360 = sphi 0, %s360
      %s362 = sphi 0, %s360
      %s363 = sphi 0, %s362
      %s377 = sphi 0, %s363
      %s381 = sphi 0, %s381
      %s383 = sphi 0, %s381
      %s384 = sphi 0, %s383
      %s398 = sphi 0, %s384
      %s402 = sphi 0, %s402
      %s404 = sphi 0, %s402
      %s405 = sphi 0, %s404
      %s419 = sphi 0, %s405
      %s425 = sphi 0, %s427
      %s428 = sphi 0, %s425
      %s429 = sphi 0, %s428
      %s445 = sphi 0, %s429
    $region4: #{brain_gcn_forward.1} parent=1 // loop_header_branch
      %30 = sbr.rel (%p28) target = $region8
    $region5: #{brain_gcn_forward.1} parent=1 // loop_body
      %s32 = ssub.s32 %s27, 1
      %s33 = ssub.s32 %s27, 2
      %s34 = sadd.s32 %s27, 1
      %s35 = ssub.s32 %s27, %s34
      %p36 = scmp.eq.s32.totalorder %s35, 0
      %s38 = sadd.s32 %s37, 1
      %s39 = scalar_select %p36, %s37, %s38
      %p42 = pneg %p36
      %p43 = scmp.eq.s32.totalorder %s27, 1
      %p44 = por %p42, %p43
      %p45 = scmp.ne.s32.totalorder %s37, %s40
      %p46 = scmp.eq.s32.totalorder %s27, 0
      %p47 = por %p45, %p46
      %p48 = scmp.ne.s32.totalorder %s37, %s40
      %p49 = scmp.eq.s32.totalorder %s32, 1
      %p50 = por %p48, %p49
      %p51 = scmp.ne.s32.totalorder %s40, %s41
      %p52 = scmp.eq.s32.totalorder %s32, 0
      %p53 = por %p51, %p52
      %p54 = scmp.ne.s32.totalorder %s40, %s41
      %p55 = scmp.eq.s32.totalorder %s33, 1
      %p56 = por %p54, %p55
      %p58 = scmp.ne.s32.totalorder %s41, %s57
      %p59 = scmp.eq.s32.totalorder %s33, 0
      %p60 = por %p58, %p59
      %s61 = ssub.s32 %s27, %s34
      %p62 = scmp.eq.s32.totalorder %s61, 0
      %s64 = sadd.s32 %s63, 1
      %s65 = scalar_select %p62, %s63, %s64
      %p68 = pneg %p62
      %p69 = scmp.eq.s32.totalorder %s27, 1
      %p70 = por %p68, %p69
      %p71 = scmp.ne.s32.totalorder %s63, %s66
      %p72 = scmp.eq.s32.totalorder %s27, 0
      %p73 = por %p71, %p72
      %p74 = scmp.ne.s32.totalorder %s63, %s66
      %p75 = scmp.eq.s32.totalorder %s32, 1
      %p76 = por %p74, %p75
      %p77 = scmp.ne.s32.totalorder %s66, %s67
      %p78 = scmp.eq.s32.totalorder %s32, 0
      %p79 = por %p77, %p78
      %p80 = scmp.ne.s32.totalorder %s66, %s67
      %p81 = scmp.eq.s32.totalorder %s33, 1
      %p82 = por %p80, %p81
      %p84 = scmp.ne.s32.totalorder %s67, %s83
      %p85 = scmp.eq.s32.totalorder %s33, 0
      %p86 = por %p84, %p85
      %s88 = sadd.s32 %s87, 1
      %p91 = scmp.eq.s32.totalorder %s27, 1
      %p92 = scmp.ne.s32.totalorder %s87, %s89
      %p93 = scmp.eq.s32.totalorder %s27, 0
      %p94 = por %p92, %p93
      %p95 = scmp.ne.s32.totalorder %s87, %s89
      %p96 = scmp.eq.s32.totalorder %s32, 1
      %p97 = por %p95, %p96
      %p98 = scmp.ne.s32.totalorder %s89, %s90
      %p99 = scmp.eq.s32.totalorder %s32, 0
      %p100 = por %p98, %p99
      %p101 = scmp.ne.s32.totalorder %s89, %s90
      %p102 = scmp.eq.s32.totalorder %s33, 1
      %p103 = por %p101, %p102
      %p105 = scmp.ne.s32.totalorder %s90, %s104
      %p106 = scmp.eq.s32.totalorder %s33, 0
      %p107 = por %p105, %p106
      %s109 = sadd.s32 %s108, 1
      %p112 = scmp.eq.s32.totalorder %s27, 1
      %p113 = scmp.ne.s32.totalorder %s108, %s110
      %p114 = scmp.eq.s32.totalorder %s27, 0
      %p115 = por %p113, %p114
      %p116 = scmp.ne.s32.totalorder %s108, %s110
      %p117 = scmp.eq.s32.totalorder %s32, 1
      %p118 = por %p116, %p117
      %p119 = scmp.ne.s32.totalorder %s110, %s111
      %p120 = scmp.eq.s32.totalorder %s32, 0
      %p121 = por %p119, %p120
      %p122 = scmp.ne.s32.totalorder %s110, %s111
      %p123 = scmp.eq.s32.totalorder %s33, 1
      %p124 = por %p122, %p123
      %p126 = scmp.ne.s32.totalorder %s111, %s125
      %p127 = scmp.eq.s32.totalorder %s33, 0
      %p128 = por %p126, %p127
      %s130 = sadd.s32 %s129, 1
      %p133 = scmp.eq.s32.totalorder %s27, 1
      %p134 = scmp.ne.s32.totalorder %s129, %s131
      %p135 = scmp.eq.s32.totalorder %s27, 0
      %p136 = por %p134, %p135
      %p137 = scmp.ne.s32.totalorder %s129, %s131
      %p138 = scmp.eq.s32.totalorder %s32, 1
      %p139 = por %p137, %p138
      %p140 = scmp.ne.s32.totalorder %s131, %s132
      %p141 = scmp.eq.s32.totalorder %s32, 0
      %p142 = por %p140, %p141
      %p143 = scmp.ne.s32.totalorder %s131, %s132
      %p144 = scmp.eq.s32.totalorder %s33, 1
      %p145 = por %p143, %p144
      %p147 = scmp.ne.s32.totalorder %s132, %s146
      %p148 = scmp.eq.s32.totalorder %s33, 0
      %p149 = por %p147, %p148
      %s151 = sadd.s32 %s150, 1
      %p154 = scmp.eq.s32.totalorder %s27, 1
      %p155 = scmp.ne.s32.totalorder %s150, %s152
      %p156 = scmp.eq.s32.totalorder %s27, 0
      %p157 = por %p155, %p156
      %p158 = scmp.ne.s32.totalorder %s150, %s152
      %p159 = scmp.eq.s32.totalorder %s32, 1
      %p160 = por %p158, %p159
      %p161 = scmp.ne.s32.totalorder %s152, %s153
      %p162 = scmp.eq.s32.totalorder %s32, 0
      %p163 = por %p161, %p162
      %p164 = scmp.ne.s32.totalorder %s152, %s153
      %p165 = scmp.eq.s32.totalorder %s33, 1
      %p166 = por %p164, %p165
      %p168 = scmp.ne.s32.totalorder %s153, %s167
      %p169 = scmp.eq.s32.totalorder %s33, 0
      %p170 = por %p168, %p169
      %s172 = sadd.s32 %s171, 1
      %p175 = scmp.eq.s32.totalorder %s27, 1
      %p176 = scmp.ne.s32.totalorder %s171, %s173
      %p177 = scmp.eq.s32.totalorder %s27, 0
      %p178 = por %p176, %p177
      %p179 = scmp.ne.s32.totalorder %s171, %s173
      %p180 = scmp.eq.s32.totalorder %s32, 1
      %p181 = por %p179, %p180
      %p182 = scmp.ne.s32.totalorder %s173, %s174
      %p183 = scmp.eq.s32.totalorder %s32, 0
      %p184 = por %p182, %p183
      %p185 = scmp.ne.s32.totalorder %s173, %s174
      %p186 = scmp.eq.s32.totalorder %s33, 1
      %p187 = por %p185, %p186
      %p189 = scmp.ne.s32.totalorder %s174, %s188
      %p190 = scmp.eq.s32.totalorder %s33, 0
      %p191 = por %p189, %p190
      %s193 = sadd.s32 %s192, 1
      %p196 = scmp.eq.s32.totalorder %s27, 1
      %p197 = scmp.ne.s32.totalorder %s192, %s194
      %p198 = scmp.eq.s32.totalorder %s27, 0
      %p199 = por %p197, %p198
      %p200 = scmp.ne.s32.totalorder %s192, %s194
      %p201 = scmp.eq.s32.totalorder %s32, 1
      %p202 = por %p200, %p201
      %p203 = scmp.ne.s32.totalorder %s194, %s195
      %p204 = scmp.eq.s32.totalorder %s32, 0
      %p205 = por %p203, %p204
      %p206 = scmp.ne.s32.totalorder %s194, %s195
      %p207 = scmp.eq.s32.totalorder %s33, 1
      %p208 = por %p206, %p207
      %p210 = scmp.ne.s32.totalorder %s195, %s209
      %p211 = scmp.eq.s32.totalorder %s33, 0
      %p212 = por %p210, %p211
      %s214 = sadd.s32 %s213, 1
      %p217 = scmp.eq.s32.totalorder %s27, 1
      %p218 = scmp.ne.s32.totalorder %s213, %s215
      %p219 = scmp.eq.s32.totalorder %s27, 0
      %p220 = por %p218, %p219
      %p221 = scmp.ne.s32.totalorder %s213, %s215
      %p222 = scmp.eq.s32.totalorder %s32, 1
      %p223 = por %p221, %p222
      %p224 = scmp.ne.s32.totalorder %s215, %s216
      %p225 = scmp.eq.s32.totalorder %s32, 0
      %p226 = por %p224, %p225
      %p227 = scmp.ne.s32.totalorder %s215, %s216
      %p228 = scmp.eq.s32.totalorder %s33, 1
      %p229 = por %p227, %p228
      %p231 = scmp.ne.s32.totalorder %s216, %s230
      %p232 = scmp.eq.s32.totalorder %s33, 0
      %p233 = por %p231, %p232
      %s235 = sadd.s32 %s234, 1
      %p238 = scmp.eq.s32.totalorder %s27, 1
      %p239 = scmp.ne.s32.totalorder %s234, %s236
      %p240 = scmp.eq.s32.totalorder %s27, 0
      %p241 = por %p239, %p240
      %p242 = scmp.ne.s32.totalorder %s234, %s236
      %p243 = scmp.eq.s32.totalorder %s32, 1
      %p244 = por %p242, %p243
      %p245 = scmp.ne.s32.totalorder %s236, %s237
      %p246 = scmp.eq.s32.totalorder %s32, 0
      %p247 = por %p245, %p246
      %p248 = scmp.ne.s32.totalorder %s236, %s237
      %p249 = scmp.eq.s32.totalorder %s33, 1
      %p250 = por %p248, %p249
      %p252 = scmp.ne.s32.totalorder %s237, %s251
      %p253 = scmp.eq.s32.totalorder %s33, 0
      %p254 = por %p252, %p253
      %s256 = sadd.s32 %s255, 1
      %p259 = scmp.eq.s32.totalorder %s27, 1
      %p260 = scmp.ne.s32.totalorder %s255, %s257
      %p261 = scmp.eq.s32.totalorder %s27, 0
      %p262 = por %p260, %p261
      %p263 = scmp.ne.s32.totalorder %s255, %s257
      %p264 = scmp.eq.s32.totalorder %s32, 1
      %p265 = por %p263, %p264
      %p266 = scmp.ne.s32.totalorder %s257, %s258
      %p267 = scmp.eq.s32.totalorder %s32, 0
      %p268 = por %p266, %p267
      %p269 = scmp.ne.s32.totalorder %s257, %s258
      %p270 = scmp.eq.s32.totalorder %s33, 1
      %p271 = por %p269, %p270
      %p273 = scmp.ne.s32.totalorder %s258, %s272
      %p274 = scmp.eq.s32.totalorder %s33, 0
      %p275 = por %p273, %p274
      %s277 = sadd.s32 %s276, 1
      %p280 = scmp.eq.s32.totalorder %s27, 1
      %p281 = scmp.ne.s32.totalorder %s276, %s278
      %p282 = scmp.eq.s32.totalorder %s27, 0
      %p283 = por %p281, %p282
      %p284 = scmp.ne.s32.totalorder %s276, %s278
      %p285 = scmp.eq.s32.totalorder %s32, 1
      %p286 = por %p284, %p285
      %p287 = scmp.ne.s32.totalorder %s278, %s279
      %p288 = scmp.eq.s32.totalorder %s32, 0
      %p289 = por %p287, %p288
      %p290 = scmp.ne.s32.totalorder %s278, %s279
      %p291 = scmp.eq.s32.totalorder %s33, 1
      %p292 = por %p290, %p291
      %p294 = scmp.ne.s32.totalorder %s279, %s293
      %p295 = scmp.eq.s32.totalorder %s33, 0
      %p296 = por %p294, %p295
      %s298 = sadd.s32 %s297, 1
      %p301 = scmp.eq.s32.totalorder %s27, 1
      %p302 = scmp.ne.s32.totalorder %s297, %s299
      %p303 = scmp.eq.s32.totalorder %s27, 0
      %p304 = por %p302, %p303
      %p305 = scmp.ne.s32.totalorder %s297, %s299
      %p306 = scmp.eq.s32.totalorder %s32, 1
      %p307 = por %p305, %p306
      %p308 = scmp.ne.s32.totalorder %s299, %s300
      %p309 = scmp.eq.s32.totalorder %s32, 0
      %p310 = por %p308, %p309
      %p311 = scmp.ne.s32.totalorder %s299, %s300
      %p312 = scmp.eq.s32.totalorder %s33, 1
      %p313 = por %p311, %p312
      %p315 = scmp.ne.s32.totalorder %s300, %s314
      %p316 = scmp.eq.s32.totalorder %s33, 0
      %p317 = por %p315, %p316
      %s319 = sadd.s32 %s318, 1
      %p322 = scmp.eq.s32.totalorder %s27, 1
      %p323 = scmp.ne.s32.totalorder %s318, %s320
      %p324 = scmp.eq.s32.totalorder %s27, 0
      %p325 = por %p323, %p324
      %p326 = scmp.ne.s32.totalorder %s318, %s320
      %p327 = scmp.eq.s32.totalorder %s32, 1
      %p328 = por %p326, %p327
      %p329 = scmp.ne.s32.totalorder %s320, %s321
      %p330 = scmp.eq.s32.totalorder %s32, 0
      %p331 = por %p329, %p330
      %p332 = scmp.ne.s32.totalorder %s320, %s321
      %p333 = scmp.eq.s32.totalorder %s33, 1
      %p334 = por %p332, %p333
      %p336 = scmp.ne.s32.totalorder %s321, %s335
      %p337 = scmp.eq.s32.totalorder %s33, 0
      %p338 = por %p336, %p337
      %s340 = sadd.s32 %s339, 1
      %p343 = scmp.eq.s32.totalorder %s27, 1
      %p344 = scmp.ne.s32.totalorder %s339, %s341
      %p345 = scmp.eq.s32.totalorder %s27, 0
      %p346 = por %p344, %p345
      %p347 = scmp.ne.s32.totalorder %s339, %s341
      %p348 = scmp.eq.s32.totalorder %s32, 1
      %p349 = por %p347, %p348
      %p350 = scmp.ne.s32.totalorder %s341, %s342
      %p351 = scmp.eq.s32.totalorder %s32, 0
      %p352 = por %p350, %p351
      %p353 = scmp.ne.s32.totalorder %s341, %s342
      %p354 = scmp.eq.s32.totalorder %s33, 1
      %p355 = por %p353, %p354
      %p357 = scmp.ne.s32.totalorder %s342, %s356
      %p358 = scmp.eq.s32.totalorder %s33, 0
      %p359 = por %p357, %p358
      %s361 = sadd.s32 %s360, 1
      %p364 = scmp.eq.s32.totalorder %s27, 1
      %p365 = scmp.ne.s32.totalorder %s360, %s362
      %p366 = scmp.eq.s32.totalorder %s27, 0
      %p367 = por %p365, %p366
      %p368 = scmp.ne.s32.totalorder %s360, %s362
      %p369 = scmp.eq.s32.totalorder %s32, 1
      %p370 = por %p368, %p369
      %p371 = scmp.ne.s32.totalorder %s362, %s363
      %p372 = scmp.eq.s32.totalorder %s32, 0
      %p373 = por %p371, %p372
      %p374 = scmp.ne.s32.totalorder %s362, %s363
      %p375 = scmp.eq.s32.totalorder %s33, 1
      %p376 = por %p374, %p375
      %p378 = scmp.ne.s32.totalorder %s363, %s377
      %p379 = scmp.eq.s32.totalorder %s33, 0
      %p380 = por %p378, %p379
      %s382 = sadd.s32 %s381, 1
      %p385 = scmp.eq.s32.totalorder %s27, 1
      %p386 = scmp.ne.s32.totalorder %s381, %s383
      %p387 = scmp.eq.s32.totalorder %s27, 0
      %p388 = por %p386, %p387
      %p389 = scmp.ne.s32.totalorder %s381, %s383
      %p390 = scmp.eq.s32.totalorder %s32, 1
      %p391 = por %p389, %p390
      %p392 = scmp.ne.s32.totalorder %s383, %s384
      %p393 = scmp.eq.s32.totalorder %s32, 0
      %p394 = por %p392, %p393
      %p395 = scmp.ne.s32.totalorder %s383, %s384
      %p396 = scmp.eq.s32.totalorder %s33, 1
      %p397 = por %p395, %p396
      %p399 = scmp.ne.s32.totalorder %s384, %s398
      %p400 = scmp.eq.s32.totalorder %s33, 0
      %p401 = por %p399, %p400
      %s403 = sadd.s32 %s402, 1
      %p406 = scmp.eq.s32.totalorder %s27, 1
      %p407 = scmp.ne.s32.totalorder %s402, %s404
      %p408 = scmp.eq.s32.totalorder %s27, 0
      %p409 = por %p407, %p408
      %p410 = scmp.ne.s32.totalorder %s402, %s404
      %p411 = scmp.eq.s32.totalorder %s32, 1
      %p412 = por %p410, %p411
      %p413 = scmp.ne.s32.totalorder %s404, %s405
      %p414 = scmp.eq.s32.totalorder %s32, 0
      %p415 = por %p413, %p414
      %p416 = scmp.ne.s32.totalorder %s404, %s405
      %p417 = scmp.eq.s32.totalorder %s33, 1
      %p418 = por %p416, %p417
      %p420 = scmp.ne.s32.totalorder %s405, %s419
      %p421 = scmp.eq.s32.totalorder %s33, 0
      %p422 = por %p420, %p421
      %s423 = ssub.s32 %s27, %s34
      %p424 = scmp.eq.s32.totalorder %s423, 0
      %s426 = sadd.s32 %s425, 1
      %s427 = scalar_select %p424, %s425, %s426
      %p430 = pneg %p424
      %p431 = scmp.eq.s32.totalorder %s27, 1
      %p432 = por %p430, %p431
      %p433 = scmp.ne.s32.totalorder %s425, %s428
      %p434 = scmp.eq.s32.totalorder %s27, 0
      %p435 = por %p433, %p434
      %p436 = scmp.ne.s32.totalorder %s425, %s428
      %p437 = scmp.eq.s32.totalorder %s32, 1
      %p438 = por %p436, %p437
      %p439 = scmp.ne.s32.totalorder %s428, %s429
      %p440 = scmp.eq.s32.totalorder %s32, 0
      %p441 = por %p439, %p440
      %p442 = scmp.ne.s32.totalorder %s428, %s429
      %p443 = scmp.eq.s32.totalorder %s33, 1
      %p444 = por %p442, %p443
      %p446 = scmp.ne.s32.totalorder %s429, %s445
      %p447 = scmp.eq.s32.totalorder %s33, 0
      %p448 = por %p446, %p447
      %p449 = scmp.le.s32.totalorder 1, %s27
      %p450 = scmp.lt.s32.totalorder %s27, 3
      %p451 = pnand %p449, %p450
      %p452 = pneg %p451
      // Predicated region
      $region9: #{brain_gcn_forward.1} parent=5 // pred_check
        _
      $region10: #{brain_gcn_forward.1} parent=5 // pred_check_branch
        %454 = sbr.rel (%p451) target = $region12
      $region11: #{brain_gcn_forward.1} parent=5 // pred_region
        %s455 = ssub.s32 %s27, 1
        // Predicated region
        $region13: #{brain_gcn_forward.1} parent=11 // pred_check
          %p456 = pneg %p100
        $region14: #{brain_gcn_forward.1} parent=11 // pred_check_branch
          %458 = sbr.rel (%p456) target = $region16
        $region15: #{brain_gcn_forward.1} parent=11 // pred_region
          _
        $region16: #{brain_gcn_forward.1} parent=11 // pred_fallthru
          _
        // Predicated region
        $region17: #{brain_gcn_forward.1} parent=11 // pred_check
          %p459 = pneg %p121
        $region18: #{brain_gcn_forward.1} parent=11 // pred_check_branch
          %461 = sbr.rel (%p459) target = $region20
        $region19: #{brain_gcn_forward.1} parent=11 // pred_region
          _
        $region20: #{brain_gcn_forward.1} parent=11 // pred_fallthru
          _
        // Predicated region
        $region21: #{brain_gcn_forward.1} parent=11 // pred_check
          %p462 = pneg %p142
        $region22: #{brain_gcn_forward.1} parent=11 // pred_check_branch
          %464 = sbr.rel (%p462) target = $region24
        $region23: #{brain_gcn_forward.1} parent=11 // pred_region
          _
        $region24: #{brain_gcn_forward.1} parent=11 // pred_fallthru
          _
        // Predicated region
        $region25: #{brain_gcn_forward.1} parent=11 // pred_check
          %p465 = pneg %p163
        $region26: #{brain_gcn_forward.1} parent=11 // pred_check_branch
          %467 = sbr.rel (%p465) target = $region28
        $region27: #{brain_gcn_forward.1} parent=11 // pred_region
          _
        $region28: #{brain_gcn_forward.1} parent=11 // pred_fallthru
          _
        // Predicated region
        $region29: #{brain_gcn_forward.1} parent=11 // pred_check
          %p468 = pneg %p184
        $region30: #{brain_gcn_forward.1} parent=11 // pred_check_branch
          %470 = sbr.rel (%p468) target = $region32
        $region31: #{brain_gcn_forward.1} parent=11 // pred_region
          _
        $region32: #{brain_gcn_forward.1} parent=11 // pred_fallthru
          _
        // Predicated region
        $region33: #{brain_gcn_forward.1} parent=11 // pred_check
          %p471 = pneg %p205
        $region34: #{brain_gcn_forward.1} parent=11 // pred_check_branch
          %473 = sbr.rel (%p471) target = $region36
        $region35: #{brain_gcn_forward.1} parent=11 // pred_region
          _
        $region36: #{brain_gcn_forward.1} parent=11 // pred_fallthru
          _
        // Predicated region
        $region37: #{brain_gcn_forward.1} parent=11 // pred_check
          %p474 = pneg %p226
        $region38: #{brain_gcn_forward.1} parent=11 // pred_check_branch
          %476 = sbr.rel (%p474) target = $region40
        $region39: #{brain_gcn_forward.1} parent=11 // pred_region
          _
        $region40: #{brain_gcn_forward.1} parent=11 // pred_fallthru
          _
        // Predicated region
        $region41: #{brain_gcn_forward.1} parent=11 // pred_check
          %p477 = pneg %p247
        $region42: #{brain_gcn_forward.1} parent=11 // pred_check_branch
          %479 = sbr.rel (%p477) target = $region44
        $region43: #{brain_gcn_forward.1} parent=11 // pred_region
          _
        $region44: #{brain_gcn_forward.1} parent=11 // pred_fallthru
          _
        // Predicated region
        $region45: #{brain_gcn_forward.1} parent=11 // pred_check
          %p480 = pneg %p268
        $region46: #{brain_gcn_forward.1} parent=11 // pred_check_branch
          %482 = sbr.rel (%p480) target = $region48
        $region47: #{brain_gcn_forward.1} parent=11 // pred_region
          _
        $region48: #{brain_gcn_forward.1} parent=11 // pred_fallthru
          _
        // Predicated region
        $region49: #{brain_gcn_forward.1} parent=11 // pred_check
          %p483 = pneg %p289
        $region50: #{brain_gcn_forward.1} parent=11 // pred_check_branch
          %485 = sbr.rel (%p483) target = $region52
        $region51: #{brain_gcn_forward.1} parent=11 // pred_region
          _
        $region52: #{brain_gcn_forward.1} parent=11 // pred_fallthru
          _
        // Predicated region
        $region53: #{brain_gcn_forward.1} parent=11 // pred_check
          %p486 = pneg %p310
        $region54: #{brain_gcn_forward.1} parent=11 // pred_check_branch
          %488 = sbr.rel (%p486) target = $region56
        $region55: #{brain_gcn_forward.1} parent=11 // pred_region
          _
        $region56: #{brain_gcn_forward.1} parent=11 // pred_fallthru
          _
        // Predicated region
        $region57: #{brain_gcn_forward.1} parent=11 // pred_check
          %p489 = pneg %p331
        $region58: #{brain_gcn_forward.1} parent=11 // pred_check_branch
          %491 = sbr.rel (%p489) target = $region60
        $region59: #{brain_gcn_forward.1} parent=11 // pred_region
          _
        $region60: #{brain_gcn_forward.1} parent=11 // pred_fallthru
          _
        // Predicated region
        $region61: #{brain_gcn_forward.1} parent=11 // pred_check
          %p492 = pneg %p352
        $region62: #{brain_gcn_forward.1} parent=11 // pred_check_branch
          %494 = sbr.rel (%p492) target = $region64
        $region63: #{brain_gcn_forward.1} parent=11 // pred_region
          _
        $region64: #{brain_gcn_forward.1} parent=11 // pred_fallthru
          _
        // Predicated region
        $region65: #{brain_gcn_forward.1} parent=11 // pred_check
          %p495 = pneg %p373
        $region66: #{brain_gcn_forward.1} parent=11 // pred_check_branch
          %497 = sbr.rel (%p495) target = $region68
        $region67: #{brain_gcn_forward.1} parent=11 // pred_region
          _
        $region68: #{brain_gcn_forward.1} parent=11 // pred_fallthru
          _
        // Predicated region
        $region69: #{brain_gcn_forward.1} parent=11 // pred_check
          %p498 = pneg %p394
        $region70: #{brain_gcn_forward.1} parent=11 // pred_check_branch
          %500 = sbr.rel (%p498) target = $region72
        $region71: #{brain_gcn_forward.1} parent=11 // pred_region
          _
        $region72: #{brain_gcn_forward.1} parent=11 // pred_fallthru
          _
        // Predicated region
        $region73: #{brain_gcn_forward.1} parent=11 // pred_check
          %p501 = pneg %p415
        $region74: #{brain_gcn_forward.1} parent=11 // pred_check_branch
          %503 = sbr.rel (%p501) target = $region76
        $region75: #{brain_gcn_forward.1} parent=11 // pred_region
          _
        $region76: #{brain_gcn_forward.1} parent=11 // pred_fallthru
          _
      $region12: #{brain_gcn_forward.1} parent=5 // pred_fallthru
        _
      %p504 = scmp.lt.s32.totalorder %s27, 2
      // Predicated region
      $region77: #{brain_gcn_forward.1} parent=5 // pred_check
        %p505 = pneg %p504
      $region78: #{brain_gcn_forward.1} parent=5 // pred_check_branch
        %507 = sbr.rel (%p505) target = $region80
      $region79: #{brain_gcn_forward.1} parent=5 // pred_region
        // Predicated region
        $region81: #{brain_gcn_forward.1} parent=79 // pred_check
          %p508 = pneg %p47
        $region82: #{brain_gcn_forward.1} parent=79 // pred_check_branch
          %510 = sbr.rel (%p508) target = $region84
        $region83: #{brain_gcn_forward.1} parent=79 // pred_region
          %s511 = smul.u32 2, %s27
          %p512 = scmp.lt.s32.totalorder %s511, 3
          %s513 = scalar_select %p512, %s511, 3
          %s514 = smul.addr %s513, 4
          %s515 = scalar_lea.vmem %s0, %s514
          %s516 = smul.u32 2, %s27
        $region84: #{brain_gcn_forward.1} parent=79 // pred_fallthru
          _
        // Predicated region
        $region85: #{brain_gcn_forward.1} parent=79 // pred_check
          %p517 = pneg %p73
        $region86: #{brain_gcn_forward.1} parent=79 // pred_check_branch
          %519 = sbr.rel (%p517) target = $region88
        $region87: #{brain_gcn_forward.1} parent=79 // pred_region
          %p520 = scmp.lt.s32.totalorder %s27, 1
          %s521 = scalar_select %p520, %s27, 1
          %s522 = smul.addr %s521, 2
          %s523 = smul.addr %s522, 4
          %s524 = scalar_lea.vmem %s1, %s523
        $region88: #{brain_gcn_forward.1} parent=79 // pred_fallthru
          _
      $region80: #{brain_gcn_forward.1} parent=5 // pred_fallthru
        _
      %p525 = scmp.le.s32.totalorder 1, %s27
      %p526 = scmp.lt.s32.totalorder %s27, 3
      %p527 = pnand %p525, %p526
      %p528 = pneg %p527
      // Predicated region
      $region89: #{brain_gcn_forward.1} parent=5 // pred_check
        _
      $region90: #{brain_gcn_forward.1} parent=5 // pred_check_branch
        %530 = sbr.rel (%p527) target = $region92
      $region91: #{brain_gcn_forward.1} parent=5 // pred_region
        %s531 = ssub.s32 %s27, 1
        %s532 = smul.u32 2, %s32
        %p533 = scmp.lt.s32.totalorder %s532, 3
        %s534 = scalar_select %p533, %s532, 3
        %s535 = smul.addr %s534, 4
        %s536 = scalar_lea.vmem %s0, %s535
        %p537 = pneg %p53
        %p538 = pneg %p50
        %p539 = scmp.lt.s32.totalorder %s32, 1
        %s540 = scalar_select %p539, %s32, 1
        %s541 = smul.addr %s540, 2
        %s542 = smul.addr %s541, 4
        %s543 = scalar_lea.vmem %s1, %s542
        %p544 = pneg %p79
        %p545 = pneg %p76
        %p546 = pneg %p100
        %p547 = pneg %p97
        %p548 = pneg %p121
        %p549 = pneg %p118
        %p550 = pneg %p142
        %p551 = pneg %p139
        %p552 = pneg %p163
        %p553 = pneg %p160
        %p554 = pneg %p184
        %p555 = pneg %p181
        %p556 = pneg %p205
        %p557 = pneg %p202
        %p558 = pneg %p226
        %p559 = pneg %p223
        %p560 = pneg %p247
        %p561 = pneg %p244
        %p562 = pneg %p268
        %p563 = pneg %p265
        %p564 = pneg %p289
        %p565 = pneg %p286
        %p566 = pneg %p310
        %p567 = pneg %p307
        %p568 = pneg %p331
        %p569 = pneg %p328
        %p570 = pneg %p352
        %p571 = pneg %p349
        %p572 = pneg %p373
        %p573 = pneg %p370
        %p574 = pneg %p394
        %p575 = pneg %p391
        %p576 = pneg %p415
        %p577 = pneg %p412
        %p578 = pneg %p441
        %p579 = pneg %p438
        %s580 = sand.u32 %s428, 1
        %s581 = scalar_lea.sflag [#allocation3], %s580
        %s582 = sand.u32 %s428, 1
        %s583 = scalar_lea.vmem [#allocation2], %s582
        %s584 = smul.u32 2, %s32
        %p585 = scmp.lt.s32.totalorder %s584, 3
        %s586 = scalar_select %p585, %s584, 3
        %s587 = smul.addr %s586, 4
        %s588 = scalar_lea.vmem %s0, %s587
        %s589 = smul.u32 2, %s32
        %p590 = scmp.lt.s32.totalorder %s32, 1
        %s591 = scalar_select %p590, %s32, 1
        %s592 = smul.addr %s591, 2
        %s593 = smul.addr %s592, 4
        %s594 = scalar_lea.vmem %s1, %s593
        %v596 = vld [vmem:[%s594] sm:$0xf]
        %v597 = vld [vmem:[%s594 + $0x4] sm:$0xf]
        %v598 = vunpack.c.l.bf16 %v596
        %v599 = vunpack.c.l.bf16 %v597
        %vm600 = vcmask 130048
        %v601 = vsel %vm600, %v598, 0.0
        %602 = vadd.xlane.f32.xlu0 %v601
        %v603 = vpop.xlane.xlu0 %602
        %v604 = vsel %vm600, %v599, 0.0
        %605 = vadd.xlane.f32.xlu0 %v604
        %v606 = vpop.xlane.xlu0 %605
        %v607 = vld [vmem:[%s588] sm:$0xf]
        %v608 = vld [vmem:[%s588 + $0x4] sm:$0xf]
        %v609 = vld [vmem:[%s2] sm:$0xf]
        %v610 = vld [vmem:[%s2 + $0x4] sm:$0xf]
        %v611 = vld [vmem:[%s3] sm:$0xf]
        %v612 = vld [vmem:[%s3 + $0x4] sm:$0xf]
        %v615 = vunpack.c.l.b16 %v607
        %v616 = vunpack.c.l.b16 %v608
        %v617 = vpack.c.b16 %v616, %v615
        %v620 = vunpack.c.l.b16 %v611
        %v621 = vunpack.c.l.b16 %v612
        %v622 = vpack.c.b16 %v621, %v620
        %v625 = vsel %vm600, %v617, 0
        %627 = vmatprep.subr.bf16.mxu0 0
        %628 = vmatpush1.bf16.msra.mxu0 0
        %629 = vmatprep.subr.bf16.mxu0 0
        %630 = vmatpush1.bf16.msra.mxu0 0
        %631 = vmatprep.subr.bf16.mxu0 0
        %632 = vmatpush1.bf16.msra.mxu0 0
        %633 = vmatprep.subr.bf16.mxu0 0
        %634 = vmatpush1.bf16.msra.mxu0 0
        %635 = vmatprep.subr.bf16.mxu0 0
        %636 = vmatpush1.bf16.msra.mxu0 0
        %637 = vmatprep.subr.bf16.mxu0 0
        %638 = vmatpush1.bf16.msra.mxu0 0
        %639 = vmatprep.subr.bf16.mxu0 0
        %640 = vmatpush1.bf16.msra.mxu0 0
        %641 = vmatprep.subr.bf16.mxu0 0
        %642 = vmatpush1.bf16.msra.mxu0 %v622
        %643 = vmatprep.subr.bf16.mxu0 0
        %644 = vmatpush2.bf16.msra.mxu0 0
        %645 = vmatprep.subr.bf16.mxu0 0
        %646 = vmatpush2.bf16.msra.mxu0 0
        %647 = vmatprep.subr.bf16.mxu0 0
        %648 = vmatpush2.bf16.msra.mxu0 0
        %649 = vmatprep.subr.bf16.mxu0 0
        %650 = vmatpush2.bf16.msra.mxu0 0
        %651 = vmatprep.subr.bf16.mxu0 0
        %652 = vmatpush2.bf16.msra.mxu0 0
        %653 = vmatprep.subr.bf16.mxu0 0
        %654 = vmatpush2.bf16.msra.mxu0 0
        %655 = vmatprep.subr.bf16.mxu0 0
        %656 = vmatpush2.bf16.msra.mxu0 0
        %657 = vmatprep.subr.bf16.mxu0 0
        %658 = vmatpush2.bf16.msra.mxu0 0
        %659 = vmatprep.mubr.bf16.mxu0 0
        %660 = vmatmul.mubr.bf16.gmra.mxu0 %v625
        %v661 = vpop.f32.mrf.mxu0
        %v662 = vadd.f32 0.0, %v661
        %v663 = vpop.f32.mrf.mxu0
        %v664 = vpop.f32.mrf.mxu0
        %v665 = vadd.f32 0.0, %v664
        %v666 = vpop.f32.mrf.mxu0
        %667 = vdwg.mxu0
        %v668 = vld [vmem:[%s4] sm:$0x1]
        %v670 = vlaneseq
        %v671 = vshrl.u32 %v670, 7
        %v672 = vsub.s32 0, %v671
        %v673 = vrot.slane %v668, %v672
        %v677 = vunpack.c.l.b16 %v609
        %v678 = vunpack.c.l.b16 %v610
        %v679 = vpack.c.b16 %v678, %v677
        %681 = vmatprep.subr.bf16.mxu0 0
        %682 = vmatpush1.bf16.msra.mxu0 0
        %683 = vmatprep.subr.bf16.mxu0 0
        %684 = vmatpush1.bf16.msra.mxu0 0
        %685 = vmatprep.subr.bf16.mxu0 0
        %686 = vmatpush1.bf16.msra.mxu0 0
        %687 = vmatprep.subr.bf16.mxu0 0
        %688 = vmatpush1.bf16.msra.mxu0 0
        %689 = vmatprep.subr.bf16.mxu0 0
        %690 = vmatpush1.bf16.msra.mxu0 0
        %691 = vmatprep.subr.bf16.mxu0 0
        %692 = vmatpush1.bf16.msra.mxu0 0
        %693 = vmatprep.subr.bf16.mxu0 0
        %694 = vmatpush1.bf16.msra.mxu0 0
        %695 = vmatprep.subr.bf16.mxu0 0
        %696 = vmatpush1.bf16.msra.mxu0 %v679
        %697 = vmatprep.subr.bf16.mxu0 0
        %698 = vmatpush2.bf16.msra.mxu0 0
        %699 = vmatprep.subr.bf16.mxu0 0
        %700 = vmatpush2.bf16.msra.mxu0 0
        %701 = vmatprep.subr.bf16.mxu0 0
        %702 = vmatpush2.bf16.msra.mxu0 0
        %703 = vmatprep.subr.bf16.mxu0 0
        %704 = vmatpush2.bf16.msra.mxu0 0
        %705 = vmatprep.subr.bf16.mxu0 0
        %706 = vmatpush2.bf16.msra.mxu0 0
        %707 = vmatprep.subr.bf16.mxu0 0
        %708 = vmatpush2.bf16.msra.mxu0 0
        %709 = vmatprep.subr.bf16.mxu0 0
        %710 = vmatpush2.bf16.msra.mxu0 0
        %711 = vmatprep.subr.bf16.mxu0 0
        %712 = vmatpush2.bf16.msra.mxu0 0
        %713 = vmatprep.mubr.bf16.mxu0 0
        %714 = vmatmul.mubr.bf16.gmra.mxu0 %v625
        %v715 = vpop.f32.mrf.mxu0
        %v716 = vadd.f32 %v673, %v715
        %v717 = vpop.f32.mrf.mxu0
        %v718 = vpop.f32.mrf.mxu0
        %v719 = vadd.f32 %v673, %v718
        %v720 = vpop.f32.mrf.mxu0
        %721 = vdwg.mxu0
        %v722 = vmul.f32 %v603, %v716
        %v723 = vmul.f32 %v606, %v719
        %v724 = vpack.c.bf16 %v665, %v662
        %v727 = vunpack.c.l.b16 %v596
        %v728 = vunpack.c.l.b16 %v597
        %v729 = vpack.c.b16 %v728, %v727
        %v731 = vsel %vm600, %v729, 0
        %733 = vmatprep.subr.bf16.mxu0 0
        %734 = vmatpush1.bf16.msra.mxu0 0
        %735 = vmatprep.subr.bf16.mxu0 0
        %736 = vmatpush1.bf16.msra.mxu0 0
        %737 = vmatprep.subr.bf16.mxu0 0
        %738 = vmatpush1.bf16.msra.mxu0 0
        %739 = vmatprep.subr.bf16.mxu0 0
        %740 = vmatpush1.bf16.msra.mxu0 0
        %741 = vmatprep.subr.bf16.mxu0 0
        %742 = vmatpush1.bf16.msra.mxu0 0
        %743 = vmatprep.subr.bf16.mxu0 0
        %744 = vmatpush1.bf16.msra.mxu0 0
        %745 = vmatprep.subr.bf16.mxu0 0
        %746 = vmatpush1.bf16.msra.mxu0 0
        %747 = vmatprep.subr.bf16.mxu0 0
        %748 = vmatpush1.bf16.msra.mxu0 %v724
        %749 = vmatprep.subr.bf16.mxu0 0
        %750 = vmatpush2.bf16.msra.mxu0 0
        %751 = vmatprep.subr.bf16.mxu0 0
        %752 = vmatpush2.bf16.msra.mxu0 0
        %753 = vmatprep.subr.bf16.mxu0 0
        %754 = vmatpush2.bf16.msra.mxu0 0
        %755 = vmatprep.subr.bf16.mxu0 0
        %756 = vmatpush2.bf16.msra.mxu0 0
        %757 = vmatprep.subr.bf16.mxu0 0
        %758 = vmatpush2.bf16.msra.mxu0 0
        %759 = vmatprep.subr.bf16.mxu0 0
        %760 = vmatpush2.bf16.msra.mxu0 0
        %761 = vmatprep.subr.bf16.mxu0 0
        %762 = vmatpush2.bf16.msra.mxu0 0
        %763 = vmatprep.subr.bf16.mxu0 0
        %764 = vmatpush2.bf16.msra.mxu0 0
        %765 = vmatprep.mubr.bf16.mxu0 0
        %766 = vmatmul.mubr.bf16.gmra.mxu0 %v731
        %v767 = vpop.f32.mrf.mxu0
        %v768 = vadd.f32 0.0, %v767
        %v769 = vpop.f32.mrf.mxu0
        %v770 = vpop.f32.mrf.mxu0
        %v771 = vadd.f32 0.0, %v770
        %v772 = vpop.f32.mrf.mxu0
        %773 = vdwg.mxu0
        %v774 = vadd.f32 %v722, %v768
        %v775 = vadd.f32 %v723, %v771
        %v776 = vld [vmem:[%s5] sm:$0x1]
        %v778 = vlaneseq
        %v779 = vshrl.u32 %v778, 7
        %v780 = vsub.s32 0, %v779
        %v781 = vrot.slane %v776, %v780
        %v783 = vadd.f32 %v774, %v781
        %v784 = vadd.f32 %v775, %v781
        %vm785 = vcmp.ge.f32.partialorder %v783, 0.0
        %vm786 = vcmp.ge.f32.partialorder %v784, 0.0
        %v787 = vmul.f32 %v783, 0.2
        %v788 = vmul.f32 %v784, 0.2
        %v789 = vsel %vm785, %v783, %v787
        %v790 = vsel %vm786, %v784, %v788
        %v791 = vld [vmem:[%s6] sm:$0x1]
        %v793 = vlaneseq
        %v794 = vshrl.u32 %v793, 7
        %v795 = vsub.s32 0, %v794
        %v796 = vrot.slane %v791, %v795
        %v798 = vmul.f32 %v789, %v796
        %v799 = vmul.f32 %v790, %v796
        %v800 = vld [vmem:[%s7] sm:$0x1]
        %v802 = vlaneseq
        %v803 = vshrl.u32 %v802, 7
        %v804 = vsub.s32 0, %v803
        %v805 = vrot.slane %v800, %v804
        %v807 = vadd.f32 %v798, %v805
        %v808 = vadd.f32 %v799, %v805
        %v809 = vpack.c.bf16 %v808, %v807
        %v810 = vld [vmem:[%s8] sm:$0xf]
        %v811 = vld [vmem:[%s8 + $0x4] sm:$0xf]
        %v812 = vld [vmem:[%s8 + $0x8] sm:$0xf]
        %v813 = vld [vmem:[%s8 + $0xc] sm:$0xf]
        %v814 = vld [vmem:[%s9] sm:$0xf]
        %v815 = vld [vmem:[%s9 + $0x4] sm:$0xf]
        %v816 = vld [vmem:[%s9 + $0x8] sm:$0xf]
        %v817 = vld [vmem:[%s9 + $0xc] sm:$0xf]
        %v822 = vunpack.c.l.b16 %v814
        %v823 = vunpack.c.l.b16 %v815
        %v824 = vunpack.c.l.b16 %v816
        %v825 = vunpack.c.l.b16 %v817
        %v826 = vpack.c.b16 %v823, %v822
        %v827 = vpack.c.b16 %v825, %v824
        %vm830 = vcmask 261120
        %v832 = vsel %vm830, %v809, 0
        %834 = vmatprep.subr.bf16.mxu0 0
        %835 = vmatpush1.bf16.msra.mxu0 0
        %836 = vmatprep.subr.bf16.mxu0 0
        %837 = vmatpush1.bf16.msra.mxu0 0
        %838 = vmatprep.subr.bf16.mxu0 0
        %839 = vmatpush1.bf16.msra.mxu0 0
        %840 = vmatprep.subr.bf16.mxu0 0
        %841 = vmatpush1.bf16.msra.mxu0 0
        %842 = vmatprep.subr.bf16.mxu0 0
        %843 = vmatpush1.bf16.msra.mxu0 0
        %844 = vmatprep.subr.bf16.mxu0 0
        %845 = vmatpush1.bf16.msra.mxu0 0
        %846 = vmatprep.subr.bf16.mxu0 0
        %847 = vmatpush1.bf16.msra.mxu0 %v827
        %848 = vmatprep.subr.bf16.mxu0 0
        %849 = vmatpush1.bf16.msra.mxu0 %v826
        %850 = vmatprep.subr.bf16.mxu0 0
        %851 = vmatpush2.bf16.msra.mxu0 0
        %852 = vmatprep.subr.bf16.mxu0 0
        %853 = vmatpush2.bf16.msra.mxu0 0
        %854 = vmatprep.subr.bf16.mxu0 0
        %855 = vmatpush2.bf16.msra.mxu0 0
        %856 = vmatprep.subr.bf16.mxu0 0
        %857 = vmatpush2.bf16.msra.mxu0 0
        %858 = vmatprep.subr.bf16.mxu0 0
        %859 = vmatpush2.bf16.msra.mxu0 0
        %860 = vmatprep.subr.bf16.mxu0 0
        %861 = vmatpush2.bf16.msra.mxu0 0
        %862 = vmatprep.subr.bf16.mxu0 0
        %863 = vmatpush2.bf16.msra.mxu0 0
        %864 = vmatprep.subr.bf16.mxu0 0
        %865 = vmatpush2.bf16.msra.mxu0 0
        %866 = vmatprep.mubr.bf16.mxu0 0
        %867 = vmatmul.mubr.bf16.gmra.mxu0 %v832
        %v868 = vpop.f32.mrf.mxu0
        %v869 = vadd.f32 0.0, %v868
        %v870 = vpop.f32.mrf.mxu0
        %v871 = vpop.f32.mrf.mxu0
        %v872 = vadd.f32 0.0, %v871
        %v873 = vpop.f32.mrf.mxu0
        %874 = vdwg.mxu0
        %v875 = vld [vmem:[%s10] sm:$0x1]
        %v877 = vlaneseq
        %v878 = vshrl.u32 %v877, 7
        %v879 = vsub.s32 0, %v878
        %v880 = vrot.slane %v875, %v879
        %v886 = vunpack.c.l.b16 %v810
        %v887 = vunpack.c.l.b16 %v811
        %v888 = vunpack.c.l.b16 %v812
        %v889 = vunpack.c.l.b16 %v813
        %v890 = vpack.c.b16 %v887, %v886
        %v891 = vpack.c.b16 %v889, %v888
        %894 = vmatprep.subr.bf16.mxu0 0
        %895 = vmatpush1.bf16.msra.mxu0 0
        %896 = vmatprep.subr.bf16.mxu0 0
        %897 = vmatpush1.bf16.msra.mxu0 0
        %898 = vmatprep.subr.bf16.mxu0 0
        %899 = vmatpush1.bf16.msra.mxu0 0
        %900 = vmatprep.subr.bf16.mxu0 0
        %901 = vmatpush1.bf16.msra.mxu0 0
        %902 = vmatprep.subr.bf16.mxu0 0
        %903 = vmatpush1.bf16.msra.mxu0 0
        %904 = vmatprep.subr.bf16.mxu0 0
        %905 = vmatpush1.bf16.msra.mxu0 0
        %906 = vmatprep.subr.bf16.mxu0 0
        %907 = vmatpush1.bf16.msra.mxu0 %v891
        %908 = vmatprep.subr.bf16.mxu0 0
        %909 = vmatpush1.bf16.msra.mxu0 %v890
        %910 = vmatprep.subr.bf16.mxu0 0
        %911 = vmatpush2.bf16.msra.mxu0 0
        %912 = vmatprep.subr.bf16.mxu0 0
        %913 = vmatpush2.bf16.msra.mxu0 0
        %914 = vmatprep.subr.bf16.mxu0 0
        %915 = vmatpush2.bf16.msra.mxu0 0
        %916 = vmatprep.subr.bf16.mxu0 0
        %917 = vmatpush2.bf16.msra.mxu0 0
        %918 = vmatprep.subr.bf16.mxu0 0
        %919 = vmatpush2.bf16.msra.mxu0 0
        %920 = vmatprep.subr.bf16.mxu0 0
        %921 = vmatpush2.bf16.msra.mxu0 0
        %922 = vmatprep.subr.bf16.mxu0 0
        %923 = vmatpush2.bf16.msra.mxu0 0
        %924 = vmatprep.subr.bf16.mxu0 0
        %925 = vmatpush2.bf16.msra.mxu0 0
        %926 = vmatprep.mubr.bf16.mxu0 0
        %927 = vmatmul.mubr.bf16.gmra.mxu0 %v832
        %v928 = vpop.f32.mrf.mxu0
        %v929 = vadd.f32 %v880, %v928
        %v930 = vpop.f32.mrf.mxu0
        %v931 = vpop.f32.mrf.mxu0
        %v932 = vadd.f32 %v880, %v931
        %v933 = vpop.f32.mrf.mxu0
        %934 = vdwg.mxu0
        %v935 = vmul.f32 %v603, %v929
        %v936 = vmul.f32 %v606, %v932
        %v937 = vpack.c.bf16 %v872, %v869
        %938 = vmatprep.subr.bf16.mxu0 0
        %939 = vmatpush1.bf16.msra.mxu0 0
        %940 = vmatprep.subr.bf16.mxu0 0
        %941 = vmatpush1.bf16.msra.mxu0 0
        %942 = vmatprep.subr.bf16.mxu0 0
        %943 = vmatpush1.bf16.msra.mxu0 0
        %944 = vmatprep.subr.bf16.mxu0 0
        %945 = vmatpush1.bf16.msra.mxu0 0
        %946 = vmatprep.subr.bf16.mxu0 0
        %947 = vmatpush1.bf16.msra.mxu0 0
        %948 = vmatprep.subr.bf16.mxu0 0
        %949 = vmatpush1.bf16.msra.mxu0 0
        %950 = vmatprep.subr.bf16.mxu0 0
        %951 = vmatpush1.bf16.msra.mxu0 0
        %952 = vmatprep.subr.bf16.mxu0 0
        %953 = vmatpush1.bf16.msra.mxu0 %v937
        %954 = vmatprep.subr.bf16.mxu0 0
        %955 = vmatpush2.bf16.msra.mxu0 0
        %956 = vmatprep.subr.bf16.mxu0 0
        %957 = vmatpush2.bf16.msra.mxu0 0
        %958 = vmatprep.subr.bf16.mxu0 0
        %959 = vmatpush2.bf16.msra.mxu0 0
        %960 = vmatprep.subr.bf16.mxu0 0
        %961 = vmatpush2.bf16.msra.mxu0 0
        %962 = vmatprep.subr.bf16.mxu0 0
        %963 = vmatpush2.bf16.msra.mxu0 0
        %964 = vmatprep.subr.bf16.mxu0 0
        %965 = vmatpush2.bf16.msra.mxu0 0
        %966 = vmatprep.subr.bf16.mxu0 0
        %967 = vmatpush2.bf16.msra.mxu0 0
        %968 = vmatprep.subr.bf16.mxu0 0
        %969 = vmatpush2.bf16.msra.mxu0 0
        %970 = vmatprep.mubr.bf16.mxu0 0
        %971 = vmatmul.mubr.bf16.gmra.mxu0 %v731
        %v972 = vpop.f32.mrf.mxu0
        %v973 = vadd.f32 0.0, %v972
        %v974 = vpop.f32.mrf.mxu0
        %v975 = vpop.f32.mrf.mxu0
        %v976 = vadd.f32 0.0, %v975
        %v977 = vpop.f32.mrf.mxu0
        %978 = vdwg.mxu0
        %v979 = vadd.f32 %v935, %v973
        %v980 = vadd.f32 %v936, %v976
        %v981 = vld [vmem:[%s11] sm:$0x1]
        %v983 = vlaneseq
        %v984 = vshrl.u32 %v983, 7
        %v985 = vsub.s32 0, %v984
        %v986 = vrot.slane %v981, %v985
        %v988 = vadd.f32 %v979, %v986
        %v989 = vadd.f32 %v980, %v986
        %vm990 = vcmp.ge.f32.partialorder %v988, 0.0
        %vm991 = vcmp.ge.f32.partialorder %v989, 0.0
        %v992 = vmul.f32 %v988, 0.2
        %v993 = vmul.f32 %v989, 0.2
        %v994 = vsel %vm990, %v988, %v992
        %v995 = vsel %vm991, %v989, %v993
        %v996 = vld [vmem:[%s12] sm:$0x1]
        %v998 = vlaneseq
        %v999 = vshrl.u32 %v998, 7
        %v1000 = vsub.s32 0, %v999
        %v1001 = vrot.slane %v996, %v1000
        %v1003 = vmul.f32 %v994, %v1001
        %v1004 = vmul.f32 %v995, %v1001
        %v1005 = vld [vmem:[%s13] sm:$0x1]
        %v1007 = vlaneseq
        %v1008 = vshrl.u32 %v1007, 7
        %v1009 = vsub.s32 0, %v1008
        %v1010 = vrot.slane %v1005, %v1009
        %v1012 = vadd.f32 %v1003, %v1010
        %v1013 = vadd.f32 %v1004, %v1010
        %v1014 = vpack.c.bf16 %v1013, %v1012
        %v1015 = vunpack.c.l.bf16 %v1014
        %v1016 = vunpack.c.h.bf16 %v1014
        %vm1017 = vcmask 64512
        %v1018 = vsel %vm1017, %v1015, 0.0
        %v1019 = vsel %vm1017, %v1016, 0.0
        %v1020 = vadd.f32 %v1018, %v1019
        %v1021 = vrot.slane %v1020, 4
        %v1022 = vadd.f32 %v1020, %v1021
        %v1023 = vrot.slane %v1022, 2
        %v1024 = vadd.f32 %v1022, %v1023
        %v1025 = vrot.slane %v1024, 1
        %v1026 = vadd.f32 %v1024, %v1025
        %v1027 = vmul.f32 %v1026, 0.0625
        %v1028 = vpack.c.bf16 %v1027, %v1027
        %v1029 = vld [vmem:[%s14] sm:$0xf]
        %v1030 = vld [vmem:[%s15] sm:$0x1]
        %v1032 = vsel %vm1017, %v1028, 0
        %vm1034 = vcmask 1043456
        %v1036 = vsel %vm1034, %v1029, 0
        %1038 = vmatprep.subr.bf16.mxu0 0
        %1039 = vmatpush1.bf16.msra.mxu0 0
        %1040 = vmatprep.subr.bf16.mxu0 0
        %1041 = vmatpush1.bf16.msra.mxu0 0
        %1042 = vmatprep.subr.bf16.mxu0 0
        %1043 = vmatpush1.bf16.msra.mxu0 0
        %1044 = vmatprep.subr.bf16.mxu0 0
        %1045 = vmatpush1.bf16.msra.mxu0 0
        %1046 = vmatprep.subr.bf16.mxu0 0
        %1047 = vmatpush1.bf16.msra.mxu0 0
        %1048 = vmatprep.subr.bf16.mxu0 0
        %1049 = vmatpush1.bf16.msra.mxu0 0
        %1050 = vmatprep.subr.bf16.mxu0 0
        %1051 = vmatpush1.bf16.msra.mxu0 0
        %1052 = vmatprep.subr.bf16.mxu0 0
        %1053 = vmatpush1.bf16.msra.mxu0 %v1036
        %1054 = vmatprep.subr.bf16.mxu0 0
        %1055 = vmatpush2.bf16.msra.mxu0 0
        %1056 = vmatprep.subr.bf16.mxu0 0
        %1057 = vmatpush2.bf16.msra.mxu0 0
        %1058 = vmatprep.subr.bf16.mxu0 0
        %1059 = vmatpush2.bf16.msra.mxu0 0
        %1060 = vmatprep.subr.bf16.mxu0 0
        %1061 = vmatpush2.bf16.msra.mxu0 0
        %1062 = vmatprep.subr.bf16.mxu0 0
        %1063 = vmatpush2.bf16.msra.mxu0 0
        %1064 = vmatprep.subr.bf16.mxu0 0
        %1065 = vmatpush2.bf16.msra.mxu0 0
        %1066 = vmatprep.subr.bf16.mxu0 0
        %1067 = vmatpush2.bf16.msra.mxu0 0
        %1068 = vmatprep.subr.bf16.mxu0 0
        %1069 = vmatpush2.bf16.msra.mxu0 0
        %1070 = vmatprep.mubr.bf16.mxu0 0
        %1071 = vmatmul.mubr.bf16.gmra.mxu0 %v1032
        %v1072 = vpop.f32.mrf.mxu0
        %v1073 = vadd.f32 %v1030, %v1072
        %v1074 = vpop.f32.mrf.mxu0
        %v1075 = vpop.f32.mrf.mxu0
        %v1076 = vpop.f32.mrf.mxu0
        %1077 = vdwg.mxu0
        %vm1078 = vcmp.ge.f32.partialorder %v1073, 0.0
        %v1079 = vmul.f32 %v1073, 0.2
        %v1080 = vsel %vm1078, %v1073, %v1079
        %v1081 = vpack.c.bf16 %v1080, %v1080
        %v1082 = vld [vmem:[%s16] sm:$0xf]
        %v1083 = vld [vmem:[%s16 + $0x4] sm:$0xf]
        %v1084 = vld [vmem:[%s17] sm:$0x1]
        %v1087 = vunpack.c.l.b16 %v1082
        %v1088 = vunpack.c.l.b16 %v1083
        %v1089 = vpack.c.b16 %v1088, %v1087
        %v1092 = vsel %vm600, %v1081, 0
        %1094 = vmatprep.subr.bf16.mxu0 0
        %1095 = vmatpush1.bf16.msra.mxu0 0
        %1096 = vmatprep.subr.bf16.mxu0 0
        %1097 = vmatpush1.bf16.msra.mxu0 0
        %1098 = vmatprep.subr.bf16.mxu0 0
        %1099 = vmatpush1.bf16.msra.mxu0 0
        %1100 = vmatprep.subr.bf16.mxu0 0
        %1101 = vmatpush1.bf16.msra.mxu0 0
        %1102 = vmatprep.subr.bf16.mxu0 0
        %1103 = vmatpush1.bf16.msra.mxu0 0
        %1104 = vmatprep.subr.bf16.mxu0 0
        %1105 = vmatpush1.bf16.msra.mxu0 0
        %1106 = vmatprep.subr.bf16.mxu0 0
        %1107 = vmatpush1.bf16.msra.mxu0 0
        %1108 = vmatprep.subr.bf16.mxu0 0
        %1109 = vmatpush1.bf16.msra.mxu0 %v1089
        %1110 = vmatprep.subr.bf16.mxu0 0
        %1111 = vmatpush2.bf16.msra.mxu0 0
        %1112 = vmatprep.subr.bf16.mxu0 0
        %1113 = vmatpush2.bf16.msra.mxu0 0
        %1114 = vmatprep.subr.bf16.mxu0 0
        %1115 = vmatpush2.bf16.msra.mxu0 0
        %1116 = vmatprep.subr.bf16.mxu0 0
        %1117 = vmatpush2.bf16.msra.mxu0 0
        %1118 = vmatprep.subr.bf16.mxu0 0
        %1119 = vmatpush2.bf16.msra.mxu0 0
        %1120 = vmatprep.subr.bf16.mxu0 0
        %1121 = vmatpush2.bf16.msra.mxu0 0
        %1122 = vmatprep.subr.bf16.mxu0 0
        %1123 = vmatpush2.bf16.msra.mxu0 0
        %1124 = vmatprep.subr.bf16.mxu0 0
        %1125 = vmatpush2.bf16.msra.mxu0 0
        %1126 = vmatprep.mubr.bf16.mxu0 0
        %1127 = vmatmul.mubr.bf16.gmra.mxu0 %v1092
        %v1128 = vpop.f32.mrf.mxu0
        %v1129 = vadd.f32 %v1084, %v1128
        %v1130 = vpop.f32.mrf.mxu0
        %v1131 = vpop.f32.mrf.mxu0
        %v1132 = vpop.f32.mrf.mxu0
        %1133 = vdwg.mxu0
        %vm1134 = vcmask 8192
        %1135 = vst.msk [vmem:[%s583] sm:$0x1] %vm1134, %v1129
        %s1136 = sand.u32 %s428, 1
        %s1137 = scalar_lea.sflag [#allocation3], %s1136
        %s1138 = sand.u32 %s428, 1
        %s1139 = scalar_lea.vmem [#allocation2], %s1138
        // Predicated region
        $region93: #{brain_gcn_forward.1} parent=91 // pred_check
          %p1140 = pneg %p438
        $region94: #{brain_gcn_forward.1} parent=91 // pred_check_branch
          %1142 = sbr.rel (%p1140) target = $region96
        $region95: #{brain_gcn_forward.1} parent=91 // pred_region
          %s1144 = ssub.s32 16, 16
          %1145 = vsyncadd %s1137, %s1144
          %s1146 = smul.addr %s32, 16
          %s1147 = scalar_lea.hbm %s18, %s1146
          %s1149 = sshll.u32 %s1139, 4
          %s1150 = int_to_ptr.vmem [resolvable:$true] %s1149
          %1152 = dma.vmem_to_hbm [thread:$0]  %s1150, 16, %s1147, %s1137
        $region96: #{brain_gcn_forward.1} parent=91 // pred_fallthru
          _
      $region92: #{brain_gcn_forward.1} parent=5 // pred_fallthru
        _
      %p1153 = scmp.le.s32.totalorder 2, %s27
      // Predicated region
      $region97: #{brain_gcn_forward.1} parent=5 // pred_check
        %p1154 = pneg %p1153
      $region98: #{brain_gcn_forward.1} parent=5 // pred_check_branch
        %1156 = sbr.rel (%p1154) target = $region100
      $region99: #{brain_gcn_forward.1} parent=5 // pred_region
        %s1157 = ssub.s32 %s27, 2
        // Predicated region
        $region101: #{brain_gcn_forward.1} parent=99 // pred_check
          %p1158 = pneg %p444
        $region102: #{brain_gcn_forward.1} parent=99 // pred_check_branch
          %1160 = sbr.rel (%p1158) target = $region104
        $region103: #{brain_gcn_forward.1} parent=99 // pred_region
          %s1161 = sand.u32 %s429, 1
          %s1162 = scalar_lea.sflag [#allocation3], %s1161
          %s1163 = sand.u32 %s429, 1
          %s1164 = scalar_lea.vmem [#allocation2], %s1163
          %1165 = dma.done %s1162, 16
        $region104: #{brain_gcn_forward.1} parent=99 // pred_fallthru
          _
      $region100: #{brain_gcn_forward.1} parent=5 // pred_fallthru
        _
    $region6: #{brain_gcn_forward.1} parent=1 // loop_footer
      %s31 = sadd.s32 1, %s27
    $region7: #{brain_gcn_forward.1} parent=1 // loop_footer_branch
      %26 = sbr.rel target = $region3
    $region8: #{brain_gcn_forward.1} parent=1 // loop_exit
      _
    %1166 = vsyncpa [#allocation3], 1
    %s1167 = scalar_lea.sflag [#allocation3], 1
    %1168 = vsyncpa %s1167, 1

</llo_original>
